<compile_context>
chip_gen: v5e
topology: v5e:2x2
jax: 0.10.0
libtpu: 0.0.40
codegen_flags: <defaults>
</compile_context>

<pallas_src>
import functools
import math

import jax
import jax.numpy as jnp
import numpy as np
from jax import lax
from jax.experimental import pallas as pl
from jax.experimental.pallas import tpu as pltpu

# ----- deterministic stand-in "cfg" constants (plain Python, never captured) -----
SPACE_SIZE = (8000.0, 8000.0, 2000.0)   # cfg.MULTI_PERSON.SPACE_SIZE
SPACE_CENTER = (0.0, 0.0, 800.0)        # cfg.MULTI_PERSON.SPACE_CENTER
CUBE_SIZE = (16, 16, 8)                 # cfg.MULTI_PERSON.INITIAL_CUBE_SIZE
MAX_PEOPLE = 5                          # cfg.MULTI_PERSON.MAX_PEOPLE_NUM
THRESHOLD = 0.3                         # cfg.MULTI_PERSON.THRESHOLD
NUM_JOINTS = 4                          # cfg.NETWORK.NUM_JOINTS  (n_input channels)

_INT32_MIN = -2147483648


def _cpn_kernel(w_ref, b_ref, cubes_ref, root_ref, topk_ref, *, num_cand, zdim):
    # cubes_ref: (BB, C, X, L) VMEM block, L = Y*Z = 128 (lane-dense).
    # root_ref : (BB, X, L) f32 output.
    # topk_ref : (BB, 8, L) i32 output; row 0 = bitcast(topk values), row 1 = flat idx.
    BB, C, X, L = cubes_ref.shape
    zshift = int(round(math.log2(zdim)))
    lshift = int(round(math.log2(L)))
    Y = L >> zshift
    NEG = float("-inf")
    nvox = X * L
    idx_mask = (1 << (nvox - 1).bit_length()) - 1      # e.g. 2047 for 2048 voxels

    # ---- grid-/batch-invariant index planes (hoisted out of the batch loop) ----
    lane = lax.broadcasted_iota(jnp.int32, (X, L), 1)
    row = lax.broadcasted_iota(jnp.int32, (X, L), 0)
    z_id = lane & (zdim - 1)                            # explicit bit ops (no %, //)
    y_id = lane >> zshift
    flat = (row << lshift) | lane                       # x*(Y*Z) + y*Z + z
    inv_flat = (nvox - 1) - flat
    kpos = lax.broadcasted_iota(jnp.int32, (1, L), 1)
    row8 = lax.broadcasted_iota(jnp.int32, (8, L), 0)
    zeros8 = jnp.zeros((8, L), jnp.int32)

    def per_batch(bb, carry):
        cube = cubes_ref[bb]                            # (C, X, L)

        # ---- V2V stand-in: 1x1x1 conv, C channels -> 1 (VPU MACs, bias once) ----
        root = w_ref[0] * cube[0].astype(jnp.float32)
        for c in range(1, C):
            root = root + w_ref[c] * cube[c].astype(jnp.float32)
        root = root + b_ref[0]
        root_ref[bb] = root

        # ---- separable 3x3x3 max pool, stride 1, -inf padding (== pad=1) ----
        p = root
        # Z direction: neighbours are lane +/- 1, masked at z boundaries
        zm = jnp.where(z_id == 0, NEG, pltpu.roll(p, shift=1, axis=1))
        zp = jnp.where(z_id == zdim - 1, NEG, pltpu.roll(p, shift=L - 1, axis=1))
        p = jnp.maximum(p, jnp.maximum(zm, zp))
        # Y direction: neighbours are lane +/- zdim, masked at y boundaries
        ym = jnp.where(y_id == 0, NEG, pltpu.roll(p, shift=zdim, axis=1))
        yp = jnp.where(y_id == Y - 1, NEG, pltpu.roll(p, shift=L - zdim, axis=1))
        p = jnp.maximum(p, jnp.maximum(ym, yp))
        # X direction: neighbours are sublane-row +/- 1, masked at x boundaries
        xm = jnp.where(row == 0, NEG, pltpu.roll(p, shift=1, axis=0))
        xp = jnp.where(row == X - 1, NEG, pltpu.roll(p, shift=X - 1, axis=0))
        pooled = jnp.maximum(p, jnp.maximum(xm, xp))

        # NMS keep-local-maxima: (pooled == hm).float() * hm
        suppressed = jnp.where(pooled == root, root, 0.0)

        # ---- packed key: high bits = monotone f32 order, low bits = inverted index ----
        bits = pltpu.bitcast(suppressed, jnp.int32)
        mono = bits ^ jnp.where(bits < 0, jnp.int32(0x7FFFFFFF), jnp.int32(0))
        pwork = (mono & ~idx_mask) | inv_flat           # unique keys; ties -> lowest idx

        # ---- hot serial chain: exactly ONE full-array reduction per candidate ----
        keys = []
        for k in range(num_cand):
            mk = jnp.max(pwork)
            keys.append(mk)
            pwork = jnp.where(pwork == mk, jnp.int32(_INT32_MIN), pwork)

        # ---- off-chain: decode indices, recover exact values, lane-pack results ----
        vals_vec = jnp.zeros((1, L), jnp.float32)
        idxs_vec = jnp.zeros((1, L), jnp.int32)
        for k in range(num_cand):
            idx_k = (nvox - 1) - (keys[k] & idx_mask)
            val_k = jnp.max(jnp.where(flat == idx_k, suppressed, NEG))
            vals_vec = jnp.where(kpos == k, val_k, vals_vec)
            idxs_vec = jnp.where(kpos == k, idx_k, idxs_vec)

        # merged (8, L) int32 tile: one unmasked full-tile store / one output DMA
        out8 = jnp.where(
            row8 == 0, jnp.broadcast_to(pltpu.bitcast(vals_vec, jnp.int32), (8, L)),
            jnp.where(row8 == 1, jnp.broadcast_to(idxs_vec, (8, L)), zeros8))
        topk_ref[bb] = out8
        return carry

    lax.fori_loop(0, BB, per_batch, 0, unroll=True)


def cuboid_proposal_net_forward(initial_cubes, w, bias, *, num_blocks=None):
    """initial_cubes: (B, C, X, Y, Z) float32 (ProjectLayer output stand-in).
    Returns (root_cubes (B,X,Y,Z), grid_centers (B, MAX_PEOPLE, 5))."""
    B, C, X, Y, Z = initial_cubes.shape
    K = MAX_PEOPLE
    L = Y * Z
    assert L == 128 and X % 8 == 0, "lane-dense layout requires Y*Z == 128"
    assert Z & (Z - 1) == 0, "Z must be a power of two for the bit-op lane decomposition"
    assert K <= L

    if num_blocks is None:
        # 2 grid steps keep both v7x TensorCores fed ("parallel" axis); on single-TC
        # v5e/v6e the extra step costs one ~0.35 us overhead only.  Pass num_blocks=1
        # there to fold the whole batch into a single step.
        num_blocks = 2 if (B >= 2 and B % 2 == 0) else 1
    assert B % num_blocks == 0, "batch must divide evenly into grid blocks"
    BB = B // num_blocks

    cubes2d = initial_cubes.reshape(B, C, X, L)          # contiguous -> free reshape

    kernel = functools.partial(_cpn_kernel, num_cand=K, zdim=Z)
    root2d, packed = pl.pallas_call(
        kernel,
        grid=(num_blocks,),
        in_specs=[
            pl.BlockSpec(memory_space=pltpu.MemorySpace.SMEM),         # conv weight (C,)
            pl.BlockSpec(memory_space=pltpu.MemorySpace.SMEM),         # conv bias (1,)
            pl.BlockSpec((BB, C, X, L), lambda g: (g, 0, 0, 0)),       # voxel cubes
        ],
        out_specs=[
            pl.BlockSpec((BB, X, L), lambda g: (g, 0, 0)),             # root_cubes
            pl.BlockSpec((BB, 8, L), lambda g: (g, 0, 0)),             # packed top-K tile
        ],
        out_shape=[
            jax.ShapeDtypeStruct((B, X, L), jnp.float32),
            jax.ShapeDtypeStruct((B, 8, L), jnp.int32),
        ],
        compiler_params=pltpu.CompilerParams(
            dimension_semantics=("parallel",)),                        # 2x on v7x (2 TCs)
    )(w, bias, cubes2d)

    root_cubes = root2d.reshape(B, X, Y, Z)
    topk_values = lax.bitcast_convert_type(packed[:, 0, :K], jnp.float32)   # (B, K)
    flat = packed[:, 1, :K]                                                 # (B, K)

    # unravel flat voxel index -> (x, y, z)
    ux = flat // (Y * Z)
    uy = (flat // Z) % Y
    uz = flat % Z
    index3 = jnp.stack([ux, uy, uz], axis=-1).astype(jnp.float32)     # (B, K, 3)

    # ProposalLayer.get_real_loc
    cube_size = jnp.asarray(CUBE_SIZE, jnp.float32)
    grid_size = jnp.asarray(SPACE_SIZE, jnp.float32)
    grid_center = jnp.asarray(SPACE_CENTER, jnp.float32)
    loc = index3 / (cube_size - 1.0) * grid_size + grid_center - grid_size / 2.0

    # grid_centers assembly (eval branch of ProposalLayer.forward)
    grid_centers = jnp.zeros((B, K, 5), jnp.float32)
    grid_centers = grid_centers.at[:, :, 0:3].set(loc)
    grid_centers = grid_centers.at[:, :, 4].set(topk_values)
    grid_centers = grid_centers.at[:, :, 3].set(
        (topk_values > THRESHOLD).astype(jnp.float32) - 1.0)

    return root_cubes, grid_centers


if __name__ == "__main__":
    key = jax.random.PRNGKey(0)
    B, C = 4, NUM_JOINTS
    X, Y, Z = CUBE_SIZE

    # synthetic pre-projected voxel cubes (ProjectLayer output stand-in), in [0, 1]
    initial_cubes = jax.random.uniform(key, (B, C, X, Y, Z), dtype=jnp.float32)

    # deterministic 1x1x1 conv parameters (V2V stand-in)
    w = 0.25 + 0.1 * jnp.arange(C, dtype=jnp.float32)        # (C,)
    bias = jnp.array([0.05], dtype=jnp.float32)              # (1,)

    fwd = jax.jit(cuboid_proposal_net_forward)
    root_cubes, grid_centers = fwd(initial_cubes, w, bias)
    jax.block_until_ready((root_cubes, grid_centers))

    assert root_cubes.shape == (B, X, Y, Z)
    assert grid_centers.shape == (B, MAX_PEOPLE, 5)

    # ---- lightweight numpy reference check ----
    cubes_np = np.asarray(initial_cubes)
    w_np = np.asarray(w).reshape(1, C, 1, 1, 1)
    root_np = (cubes_np * w_np).sum(axis=1) + float(bias[0])
    assert np.allclose(np.asarray(root_cubes), root_np, rtol=1e-5, atol=1e-5)

    pad = np.pad(root_np, ((0, 0), (1, 1), (1, 1), (1, 1)), constant_values=-np.inf)
    pooled_np = np.full_like(root_np, -np.inf)
    for dx in range(3):
        for dy in range(3):
            for dz in range(3):
                pooled_np = np.maximum(pooled_np, pad[:, dx:dx + X, dy:dy + Y, dz:dz + Z])
    supp_np = np.where(pooled_np == root_np, root_np, 0.0)
    ref_topk = np.sort(supp_np.reshape(B, -1), axis=1)[:, ::-1][:, :MAX_PEOPLE]

    scores = np.asarray(grid_centers[:, :, 4])
    assert np.allclose(np.sort(scores, axis=1)[:, ::-1], ref_topk, atol=1e-3)

    # each proposal location must point at a voxel whose suppressed score matches
    size = np.asarray(SPACE_SIZE, np.float32)
    center = np.asarray(SPACE_CENTER, np.float32)
    csz = np.asarray(CUBE_SIZE, np.float32)
    gc = np.asarray(grid_centers)
    idx3 = np.rint((gc[:, :, 0:3] - center + size / 2.0) / size * (csz - 1.0)).astype(int)
    for b in range(B):
        for k in range(MAX_PEOPLE):
            xi, yi, zi = idx3[b, k]
            assert abs(supp_np[b, xi, yi, zi] - gc[b, k, 4]) < 1e-4
    assert np.allclose(gc[:, :, 3], (scores > THRESHOLD).astype(np.float32) - 1.0)

    print("KERNEL_OK")
</pallas_src>

<mosaic_0001>
module attributes {stable_mosaic.version = 11 : i64} {
  func.func @_cpn_kernel(%arg0: i32, %arg1: memref<4xf32, #tpu.memory_space<smem>>, %arg2: memref<1xf32, #tpu.memory_space<smem>>, %arg3: memref<2x4x16x128xf32, #tpu.memory_space<vmem>>, %arg4: memref<2x16x128xf32, #tpu.memory_space<vmem>>, %arg5: memref<2x8x128xi32, #tpu.memory_space<vmem>>) attributes {dimension_semantics = [#tpu.dimension_semantics<parallel>], iteration_bounds = array<i64: 2>, scalar_prefetch = 0 : i64, scratch_operands = 0 : i64, tpu.core_type = #tpu.core_type<tc>, window_params = [{transform_indices = @transform_0, window_bounds = array<i64: 4>}, {transform_indices = @transform_1, window_bounds = array<i64: 1>}, {transform_indices = @transform_2, window_bounds = array<i64: 2, 4, 16, 128>}, {transform_indices = @transform_3, window_bounds = array<i64: 2, 16, 128>}, {transform_indices = @transform_4, window_bounds = array<i64: 2, 8, 128>}]} {
    %0 = tpu.iota {dimensions = array<i32: 1>} : vector<16x128xi32>
    %1 = tpu.iota {dimensions = array<i32: 0>} : vector<16x128xi32>
    %c7_i32 = arith.constant 7 : i32
    %2 = vector.broadcast %c7_i32 : i32 to vector<16x128xi32>
    %3 = arith.andi %0, %2 : vector<16x128xi32>
    %c3_i32 = arith.constant 3 : i32
    %4 = vector.broadcast %c3_i32 : i32 to vector<16x128xi32>
    %5 = arith.shrsi %0, %4 : vector<16x128xi32>
    %c7_i32_0 = arith.constant 7 : i32
    %6 = vector.broadcast %c7_i32_0 : i32 to vector<16x128xi32>
    %7 = arith.shli %1, %6 : vector<16x128xi32>
    %8 = arith.ori %7, %0 : vector<16x128xi32>
    %c2047_i32 = arith.constant 2047 : i32
    %9 = vector.broadcast %c2047_i32 : i32 to vector<16x128xi32>
    %10 = arith.subi %9, %8 : vector<16x128xi32>
    %11 = tpu.iota {dimensions = array<i32: 1>} : vector<1x128xi32>
    %12 = tpu.iota {dimensions = array<i32: 0>} : vector<8x128xi32>
    %c0_i32 = arith.constant 0 : i32
    %13 = vector.broadcast %c0_i32 : i32 to vector<8x128xi32>
    %c0_i32_1 = arith.constant 0 : i32
    %14 = arith.index_cast %c0_i32_1 : i32 to index
    %c0 = arith.constant 0 : index
    %c0_2 = arith.constant 0 : index
    %c0_3 = arith.constant 0 : index
    %15 = vector.load %arg3[%14, %c0, %c0_2, %c0_3] : memref<2x4x16x128xf32, #tpu.memory_space<vmem>>, vector<1x4x16x128xf32>
    %16 = vector.shape_cast %15 : vector<1x4x16x128xf32> to vector<4x16x128xf32>
    %c0_4 = arith.constant 0 : index
    %17 = memref.load %arg1[%c0_4] : memref<4xf32, #tpu.memory_space<smem>>
    %18 = vector.extract_strided_slice %16 {offsets = [0, 0, 0], sizes = [1, 16, 128], strides = [1, 1, 1]} : vector<4x16x128xf32> to vector<1x16x128xf32>
    %19 = vector.shape_cast %18 : vector<1x16x128xf32> to vector<16x128xf32>
    %20 = vector.broadcast %17 : f32 to vector<16x128xf32>
    %21 = arith.mulf %20, %19 : vector<16x128xf32>
    %c1 = arith.constant 1 : index
    %22 = memref.load %arg1[%c1] : memref<4xf32, #tpu.memory_space<smem>>
    %23 = vector.extract_strided_slice %16 {offsets = [1, 0, 0], sizes = [1, 16, 128], strides = [1, 1, 1]} : vector<4x16x128xf32> to vector<1x16x128xf32>
    %24 = vector.shape_cast %23 : vector<1x16x128xf32> to vector<16x128xf32>
    %25 = vector.broadcast %22 : f32 to vector<16x128xf32>
    %26 = arith.mulf %25, %24 : vector<16x128xf32>
    %27 = arith.addf %21, %26 : vector<16x128xf32>
    %c2 = arith.constant 2 : index
    %28 = memref.load %arg1[%c2] : memref<4xf32, #tpu.memory_space<smem>>
    %29 = vector.extract_strided_slice %16 {offsets = [2, 0, 0], sizes = [1, 16, 128], strides = [1, 1, 1]} : vector<4x16x128xf32> to vector<1x16x128xf32>
    %30 = vector.shape_cast %29 : vector<1x16x128xf32> to vector<16x128xf32>
    %31 = vector.broadcast %28 : f32 to vector<16x128xf32>
    %32 = arith.mulf %31, %30 : vector<16x128xf32>
    %33 = arith.addf %27, %32 : vector<16x128xf32>
    %c3 = arith.constant 3 : index
    %34 = memref.load %arg1[%c3] : memref<4xf32, #tpu.memory_space<smem>>
    %35 = vector.extract_strided_slice %16 {offsets = [3, 0, 0], sizes = [1, 16, 128], strides = [1, 1, 1]} : vector<4x16x128xf32> to vector<1x16x128xf32>
    %36 = vector.shape_cast %35 : vector<1x16x128xf32> to vector<16x128xf32>
    %37 = vector.broadcast %34 : f32 to vector<16x128xf32>
    %38 = arith.mulf %37, %36 : vector<16x128xf32>
    %39 = arith.addf %33, %38 : vector<16x128xf32>
    %c0_5 = arith.constant 0 : index
    %40 = memref.load %arg2[%c0_5] : memref<1xf32, #tpu.memory_space<smem>>
    %41 = vector.broadcast %40 : f32 to vector<16x128xf32>
    %42 = arith.addf %39, %41 : vector<16x128xf32>
    %43 = arith.index_cast %c0_i32_1 : i32 to index
    %c0_6 = arith.constant 0 : index
    %c0_7 = arith.constant 0 : index
    %44 = vector.load %arg4[%43, %c0_6, %c0_7] : memref<2x16x128xf32, #tpu.memory_space<vmem>>, vector<1x16x128xf32>
    %45 = vector.shape_cast %44 : vector<1x16x128xf32> to vector<16x128xf32>
    %46 = vector.shape_cast %42 : vector<16x128xf32> to vector<1x16x128xf32>
    tpu.vector_store %arg4[%43, %c0_6, %c0_7], %46 {strides = array<i32>} : memref<2x16x128xf32, #tpu.memory_space<vmem>>, vector<1x16x128xf32>,
    %c0_i32_8 = arith.constant 0 : i32
    %47 = vector.broadcast %c0_i32_8 : i32 to vector<16x128xi32>
    %48 = arith.cmpi eq, %3, %47 : vector<16x128xi32>
    %c1_i32 = arith.constant 1 : i32
    %49 = tpu.dynamic_rotate %42 by %c1_i32 dim 1 : vector<16x128xf32>, i32 -> vector<16x128xf32>
    %cst = arith.constant 0xFF800000 : f32
    %50 = vector.broadcast %cst : f32 to vector<16x128xf32>
    %51 = arith.select %48, %50, %49 : vector<16x128xi1>, vector<16x128xf32>
    %c7_i32_9 = arith.constant 7 : i32
    %52 = vector.broadcast %c7_i32_9 : i32 to vector<16x128xi32>
    %53 = arith.cmpi eq, %3, %52 : vector<16x128xi32>
    %c127_i32 = arith.constant 127 : i32
    %54 = tpu.dynamic_rotate %42 by %c127_i32 dim 1 : vector<16x128xf32>, i32 -> vector<16x128xf32>
    %cst_10 = arith.constant 0xFF800000 : f32
    %55 = vector.broadcast %cst_10 : f32 to vector<16x128xf32>
    %56 = arith.select %53, %55, %54 : vector<16x128xi1>, vector<16x128xf32>
    %57 = arith.maximumf %51, %56 : vector<16x128xf32>
    %58 = arith.maximumf %42, %57 : vector<16x128xf32>
    %c0_i32_11 = arith.constant 0 : i32
    %59 = vector.broadcast %c0_i32_11 : i32 to vector<16x128xi32>
    %60 = arith.cmpi eq, %5, %59 : vector<16x128xi32>
    %c8_i32 = arith.constant 8 : i32
    %61 = tpu.dynamic_rotate %58 by %c8_i32 dim 1 : vector<16x128xf32>, i32 -> vector<16x128xf32>
    %cst_12 = arith.constant 0xFF800000 : f32
    %62 = vector.broadcast %cst_12 : f32 to vector<16x128xf32>
    %63 = arith.select %60, %62, %61 : vector<16x128xi1>, vector<16x128xf32>
    %c15_i32 = arith.constant 15 : i32
    %64 = vector.broadcast %c15_i32 : i32 to vector<16x128xi32>
    %65 = arith.cmpi eq, %5, %64 : vector<16x128xi32>
    %c120_i32 = arith.constant 120 : i32
    %66 = tpu.dynamic_rotate %58 by %c120_i32 dim 1 : vector<16x128xf32>, i32 -> vector<16x128xf32>
    %cst_13 = arith.constant 0xFF800000 : f32
    %67 = vector.broadcast %cst_13 : f32 to vector<16x128xf32>
    %68 = arith.select %65, %67, %66 : vector<16x128xi1>, vector<16x128xf32>
    %69 = arith.maximumf %63, %68 : vector<16x128xf32>
    %70 = arith.maximumf %58, %69 : vector<16x128xf32>
    %c0_i32_14 = arith.constant 0 : i32
    %71 = vector.broadcast %c0_i32_14 : i32 to vector<16x128xi32>
    %72 = arith.cmpi eq, %1, %71 : vector<16x128xi32>
    %c1_i32_15 = arith.constant 1 : i32
    %73 = tpu.dynamic_rotate %70 by %c1_i32_15 dim 0 : vector<16x128xf32>, i32 -> vector<16x128xf32>
    %cst_16 = arith.constant 0xFF800000 : f32
    %74 = vector.broadcast %cst_16 : f32 to vector<16x128xf32>
    %75 = arith.select %72, %74, %73 : vector<16x128xi1>, vector<16x128xf32>
    %c15_i32_17 = arith.constant 15 : i32
    %76 = vector.broadcast %c15_i32_17 : i32 to vector<16x128xi32>
    %77 = arith.cmpi eq, %1, %76 : vector<16x128xi32>
    %c15_i32_18 = arith.constant 15 : i32
    %78 = tpu.dynamic_rotate %70 by %c15_i32_18 dim 0 : vector<16x128xf32>, i32 -> vector<16x128xf32>
    %cst_19 = arith.constant 0xFF800000 : f32
    %79 = vector.broadcast %cst_19 : f32 to vector<16x128xf32>
    %80 = arith.select %77, %79, %78 : vector<16x128xi1>, vector<16x128xf32>
    %81 = arith.maximumf %75, %80 : vector<16x128xf32>
    %82 = arith.maximumf %70, %81 : vector<16x128xf32>
    %83 = arith.cmpf oeq, %82, %42 : vector<16x128xf32>
    %cst_20 = arith.constant 0.000000e+00 : f32
    %84 = vector.broadcast %cst_20 : f32 to vector<16x128xf32>
    %85 = arith.select %83, %42, %84 : vector<16x128xi1>, vector<16x128xf32>
    %86 = tpu.bitcast %85 : vector<16x128xf32> -> vector<16x128xi32>
    %c0_i32_21 = arith.constant 0 : i32
    %87 = vector.broadcast %c0_i32_21 : i32 to vector<16x128xi32>
    %88 = arith.cmpi slt, %86, %87 : vector<16x128xi32>
    %c2147483647_i32 = arith.constant 2147483647 : i32
    %c0_i32_22 = arith.constant 0 : i32
    %89 = vector.broadcast %c2147483647_i32 : i32 to vector<16x128xi32>
    %90 = vector.broadcast %c0_i32_22 : i32 to vector<16x128xi32>
    %91 = arith.select %88, %89, %90 : vector<16x128xi1>, vector<16x128xi32>
    %92 = arith.xori %86, %91 : vector<16x128xi32>
    %c-2048_i32 = arith.constant -2048 : i32
    %93 = vector.broadcast %c-2048_i32 : i32 to vector<16x128xi32>
    %94 = arith.andi %92, %93 : vector<16x128xi32>
    %95 = arith.ori %94, %10 : vector<16x128xi32>
    %96 = vector.shape_cast %95 : vector<16x128xi32> to vector<1x16x128xi32>
    %cst_23 = arith.constant dense<-2147483648> : vector<1xi32>
    %97 = vector.multi_reduction <maxsi>, %96, %cst_23 [1, 2] : vector<1x16x128xi32> to vector<1xi32>
    %98 = vector.shape_cast %97 : vector<1xi32> to vector<1x1x1xi32>
    %99 = vector.extract %98[0, 0, 0] : i32 from vector<1x1x1xi32>
    %100 = vector.broadcast %99 : i32 to vector<16x128xi32>
    %101 = arith.cmpi eq, %95, %100 : vector<16x128xi32>
    %c-2147483648_i32 = arith.constant -2147483648 : i32
    %102 = vector.broadcast %c-2147483648_i32 : i32 to vector<16x128xi32>
    %103 = arith.select %101, %102, %95 : vector<16x128xi1>, vector<16x128xi32>
    %104 = vector.shape_cast %103 : vector<16x128xi32> to vector<1x16x128xi32>
    %cst_24 = arith.constant dense<-2147483648> : vector<1xi32>
    %105 = vector.multi_reduction <maxsi>, %104, %cst_24 [1, 2] : vector<1x16x128xi32> to vector<1xi32>
    %106 = vector.shape_cast %105 : vector<1xi32> to vector<1x1x1xi32>
    %107 = vector.extract %106[0, 0, 0] : i32 from vector<1x1x1xi32>
    %108 = vector.broadcast %107 : i32 to vector<16x128xi32>
    %109 = arith.cmpi eq, %103, %108 : vector<16x128xi32>
    %c-2147483648_i32_25 = arith.constant -2147483648 : i32
    %110 = vector.broadcast %c-2147483648_i32_25 : i32 to vector<16x128xi32>
    %111 = arith.select %109, %110, %103 : vector<16x128xi1>, vector<16x128xi32>
    %112 = vector.shape_cast %111 : vector<16x128xi32> to vector<1x16x128xi32>
    %cst_26 = arith.constant dense<-2147483648> : vector<1xi32>
    %113 = vector.multi_reduction <maxsi>, %112, %cst_26 [1, 2] : vector<1x16x128xi32> to vector<1xi32>
    %114 = vector.shape_cast %113 : vector<1xi32> to vector<1x1x1xi32>
    %115 = vector.extract %114[0, 0, 0] : i32 from vector<1x1x1xi32>
    %116 = vector.broadcast %115 : i32 to vector<16x128xi32>
    %117 = arith.cmpi eq, %111, %116 : vector<16x128xi32>
    %c-2147483648_i32_27 = arith.constant -2147483648 : i32
    %118 = vector.broadcast %c-2147483648_i32_27 : i32 to vector<16x128xi32>
    %119 = arith.select %117, %118, %111 : vector<16x128xi1>, vector<16x128xi32>
    %120 = vector.shape_cast %119 : vector<16x128xi32> to vector<1x16x128xi32>
    %cst_28 = arith.constant dense<-2147483648> : vector<1xi32>
    %121 = vector.multi_reduction <maxsi>, %120, %cst_28 [1, 2] : vector<1x16x128xi32> to vector<1xi32>
    %122 = vector.shape_cast %121 : vector<1xi32> to vector<1x1x1xi32>
    %123 = vector.extract %122[0, 0, 0] : i32 from vector<1x1x1xi32>
    %124 = vector.broadcast %123 : i32 to vector<16x128xi32>
    %125 = arith.cmpi eq, %119, %124 : vector<16x128xi32>
    %c-2147483648_i32_29 = arith.constant -2147483648 : i32
    %126 = vector.broadcast %c-2147483648_i32_29 : i32 to vector<16x128xi32>
    %127 = arith.select %125, %126, %119 : vector<16x128xi1>, vector<16x128xi32>
    %128 = vector.shape_cast %127 : vector<16x128xi32> to vector<1x16x128xi32>
    %cst_30 = arith.constant dense<-2147483648> : vector<1xi32>
    %129 = vector.multi_reduction <maxsi>, %128, %cst_30 [1, 2] : vector<1x16x128xi32> to vector<1xi32>
    %130 = vector.shape_cast %129 : vector<1xi32> to vector<1x1x1xi32>
    %131 = vector.extract %130[0, 0, 0] : i32 from vector<1x1x1xi32>
    %cst_31 = arith.constant 0.000000e+00 : f32
    %132 = vector.broadcast %cst_31 : f32 to vector<1x128xf32>
    %c0_i32_32 = arith.constant 0 : i32
    %133 = vector.broadcast %c0_i32_32 : i32 to vector<1x128xi32>
    %c2047_i32_33 = arith.constant 2047 : i32
    %134 = arith.andi %99, %c2047_i32_33 : i32
    %c2047_i32_34 = arith.constant 2047 : i32
    %135 = arith.subi %c2047_i32_34, %134 : i32
    %136 = vector.broadcast %135 : i32 to vector<16x128xi32>
    %137 = arith.cmpi eq, %8, %136 : vector<16x128xi32>
    %cst_35 = arith.constant 0xFF800000 : f32
    %138 = vector.broadcast %cst_35 : f32 to vector<16x128xf32>
    %139 = arith.select %137, %85, %138 : vector<16x128xi1>, vector<16x128xf32>
    %140 = vector.shape_cast %139 : vector<16x128xf32> to vector<1x16x128xf32>
    %cst_36 = arith.constant dense<0xFF800000> : vector<1xf32>
    %141 = vector.multi_reduction <maximumf>, %140, %cst_36 [1, 2] : vector<1x16x128xf32> to vector<1xf32>
    %142 = vector.shape_cast %141 : vector<1xf32> to vector<1x1x1xf32>
    %143 = vector.extract %142[0, 0, 0] : f32 from vector<1x1x1xf32>
    %c0_i32_37 = arith.constant 0 : i32
    %144 = vector.broadcast %c0_i32_37 : i32 to vector<1x128xi32>
    %145 = arith.cmpi eq, %11, %144 : vector<1x128xi32>
    %146 = vector.broadcast %143 : f32 to vector<1x128xf32>
    %147 = arith.select %145, %146, %132 : vector<1x128xi1>, vector<1x128xf32>
    %c0_i32_38 = arith.constant 0 : i32
    %148 = vector.broadcast %c0_i32_38 : i32 to vector<1x128xi32>
    %149 = arith.cmpi eq, %11, %148 : vector<1x128xi32>
    %150 = vector.broadcast %135 : i32 to vector<1x128xi32>
    %151 = arith.select %149, %150, %133 : vector<1x128xi1>, vector<1x128xi32>
    %c2047_i32_39 = arith.constant 2047 : i32
    %152 = arith.andi %107, %c2047_i32_39 : i32
    %c2047_i32_40 = arith.constant 2047 : i32
    %153 = arith.subi %c2047_i32_40, %152 : i32
    %154 = vector.broadcast %153 : i32 to vector<16x128xi32>
    %155 = arith.cmpi eq, %8, %154 : vector<16x128xi32>
    %cst_41 = arith.constant 0xFF800000 : f32
    %156 = vector.broadcast %cst_41 : f32 to vector<16x128xf32>
    %157 = arith.select %155, %85, %156 : vector<16x128xi1>, vector<16x128xf32>
    %158 = vector.shape_cast %157 : vector<16x128xf32> to vector<1x16x128xf32>
    %cst_42 = arith.constant dense<0xFF800000> : vector<1xf32>
    %159 = vector.multi_reduction <maximumf>, %158, %cst_42 [1, 2] : vector<1x16x128xf32> to vector<1xf32>
    %160 = vector.shape_cast %159 : vector<1xf32> to vector<1x1x1xf32>
    %161 = vector.extract %160[0, 0, 0] : f32 from vector<1x1x1xf32>
    %c1_i32_43 = arith.constant 1 : i32
    %162 = vector.broadcast %c1_i32_43 : i32 to vector<1x128xi32>
    %163 = arith.cmpi eq, %11, %162 : vector<1x128xi32>
    %164 = vector.broadcast %161 : f32 to vector<1x128xf32>
    %165 = arith.select %163, %164, %147 : vector<1x128xi1>, vector<1x128xf32>
    %c1_i32_44 = arith.constant 1 : i32
    %166 = vector.broadcast %c1_i32_44 : i32 to vector<1x128xi32>
    %167 = arith.cmpi eq, %11, %166 : vector<1x128xi32>
    %168 = vector.broadcast %153 : i32 to vector<1x128xi32>
    %169 = arith.select %167, %168, %151 : vector<1x128xi1>, vector<1x128xi32>
    %c2047_i32_45 = arith.constant 2047 : i32
    %170 = arith.andi %115, %c2047_i32_45 : i32
    %c2047_i32_46 = arith.constant 2047 : i32
    %171 = arith.subi %c2047_i32_46, %170 : i32
    %172 = vector.broadcast %171 : i32 to vector<16x128xi32>
    %173 = arith.cmpi eq, %8, %172 : vector<16x128xi32>
    %cst_47 = arith.constant 0xFF800000 : f32
    %174 = vector.broadcast %cst_47 : f32 to vector<16x128xf32>
    %175 = arith.select %173, %85, %174 : vector<16x128xi1>, vector<16x128xf32>
    %176 = vector.shape_cast %175 : vector<16x128xf32> to vector<1x16x128xf32>
    %cst_48 = arith.constant dense<0xFF800000> : vector<1xf32>
    %177 = vector.multi_reduction <maximumf>, %176, %cst_48 [1, 2] : vector<1x16x128xf32> to vector<1xf32>
    %178 = vector.shape_cast %177 : vector<1xf32> to vector<1x1x1xf32>
    %179 = vector.extract %178[0, 0, 0] : f32 from vector<1x1x1xf32>
    %c2_i32 = arith.constant 2 : i32
    %180 = vector.broadcast %c2_i32 : i32 to vector<1x128xi32>
    %181 = arith.cmpi eq, %11, %180 : vector<1x128xi32>
    %182 = vector.broadcast %179 : f32 to vector<1x128xf32>
    %183 = arith.select %181, %182, %165 : vector<1x128xi1>, vector<1x128xf32>
    %c2_i32_49 = arith.constant 2 : i32
    %184 = vector.broadcast %c2_i32_49 : i32 to vector<1x128xi32>
    %185 = arith.cmpi eq, %11, %184 : vector<1x128xi32>
    %186 = vector.broadcast %171 : i32 to vector<1x128xi32>
    %187 = arith.select %185, %186, %169 : vector<1x128xi1>, vector<1x128xi32>
    %c2047_i32_50 = arith.constant 2047 : i32
    %188 = arith.andi %123, %c2047_i32_50 : i32
    %c2047_i32_51 = arith.constant 2047 : i32
    %189 = arith.subi %c2047_i32_51, %188 : i32
    %190 = vector.broadcast %189 : i32 to vector<16x128xi32>
    %191 = arith.cmpi eq, %8, %190 : vector<16x128xi32>
    %cst_52 = arith.constant 0xFF800000 : f32
    %192 = vector.broadcast %cst_52 : f32 to vector<16x128xf32>
    %193 = arith.select %191, %85, %192 : vector<16x128xi1>, vector<16x128xf32>
    %194 = vector.shape_cast %193 : vector<16x128xf32> to vector<1x16x128xf32>
    %cst_53 = arith.constant dense<0xFF800000> : vector<1xf32>
    %195 = vector.multi_reduction <maximumf>, %194, %cst_53 [1, 2] : vector<1x16x128xf32> to vector<1xf32>
    %196 = vector.shape_cast %195 : vector<1xf32> to vector<1x1x1xf32>
    %197 = vector.extract %196[0, 0, 0] : f32 from vector<1x1x1xf32>
    %c3_i32_54 = arith.constant 3 : i32
    %198 = vector.broadcast %c3_i32_54 : i32 to vector<1x128xi32>
    %199 = arith.cmpi eq, %11, %198 : vector<1x128xi32>
    %200 = vector.broadcast %197 : f32 to vector<1x128xf32>
    %201 = arith.select %199, %200, %183 : vector<1x128xi1>, vector<1x128xf32>
    %c3_i32_55 = arith.constant 3 : i32
    %202 = vector.broadcast %c3_i32_55 : i32 to vector<1x128xi32>
    %203 = arith.cmpi eq, %11, %202 : vector<1x128xi32>
    %204 = vector.broadcast %189 : i32 to vector<1x128xi32>
    %205 = arith.select %203, %204, %187 : vector<1x128xi1>, vector<1x128xi32>
    %c2047_i32_56 = arith.constant 2047 : i32
    %206 = arith.andi %131, %c2047_i32_56 : i32
    %c2047_i32_57 = arith.constant 2047 : i32
    %207 = arith.subi %c2047_i32_57, %206 : i32
    %208 = vector.broadcast %207 : i32 to vector<16x128xi32>
    %209 = arith.cmpi eq, %8, %208 : vector<16x128xi32>
    %cst_58 = arith.constant 0xFF800000 : f32
    %210 = vector.broadcast %cst_58 : f32 to vector<16x128xf32>
    %211 = arith.select %209, %85, %210 : vector<16x128xi1>, vector<16x128xf32>
    %212 = vector.shape_cast %211 : vector<16x128xf32> to vector<1x16x128xf32>
    %cst_59 = arith.constant dense<0xFF800000> : vector<1xf32>
    %213 = vector.multi_reduction <maximumf>, %212, %cst_59 [1, 2] : vector<1x16x128xf32> to vector<1xf32>
    %214 = vector.shape_cast %213 : vector<1xf32> to vector<1x1x1xf32>
    %215 = vector.extract %214[0, 0, 0] : f32 from vector<1x1x1xf32>
    %c4_i32 = arith.constant 4 : i32
    %216 = vector.broadcast %c4_i32 : i32 to vector<1x128xi32>
    %217 = arith.cmpi eq, %11, %216 : vector<1x128xi32>
    %218 = vector.broadcast %215 : f32 to vector<1x128xf32>
    %219 = arith.select %217, %218, %201 : vector<1x128xi1>, vector<1x128xf32>
    %c4_i32_60 = arith.constant 4 : i32
    %220 = vector.broadcast %c4_i32_60 : i32 to vector<1x128xi32>
    %221 = arith.cmpi eq, %11, %220 : vector<1x128xi32>
    %222 = vector.broadcast %207 : i32 to vector<1x128xi32>
    %223 = arith.select %221, %222, %205 : vector<1x128xi1>, vector<1x128xi32>
    %c0_i32_61 = arith.constant 0 : i32
    %224 = vector.broadcast %c0_i32_61 : i32 to vector<8x128xi32>
    %225 = arith.cmpi eq, %12, %224 : vector<8x128xi32>
    %226 = tpu.bitcast %219 : vector<1x128xf32> -> vector<1x128xi32>
    %227 = vector.shape_cast %226 : vector<1x128xi32> to vector<1x128xi32>
    %228 = vector.broadcast %227 : vector<1x128xi32> to vector<8x128xi32>
    %c1_i32_62 = arith.constant 1 : i32
    %229 = vector.broadcast %c1_i32_62 : i32 to vector<8x128xi32>
    %230 = arith.cmpi eq, %12, %229 : vector<8x128xi32>
    %231 = vector.shape_cast %223 : vector<1x128xi32> to vector<1x128xi32>
    %232 = vector.broadcast %231 : vector<1x128xi32> to vector<8x128xi32>
    %233 = arith.select %230, %232, %13 : vector<8x128xi1>, vector<8x128xi32>
    %234 = arith.select %225, %228, %233 : vector<8x128xi1>, vector<8x128xi32>
    %235 = arith.index_cast %c0_i32_1 : i32 to index
    %c0_63 = arith.constant 0 : index
    %c0_64 = arith.constant 0 : index
    %236 = vector.load %arg5[%235, %c0_63, %c0_64] : memref<2x8x128xi32, #tpu.memory_space<vmem>>, vector<1x8x128xi32>
    %237 = vector.shape_cast %236 : vector<1x8x128xi32> to vector<8x128xi32>
    %238 = vector.shape_cast %234 : vector<8x128xi32> to vector<1x8x128xi32>
    tpu.vector_store %arg5[%235, %c0_63, %c0_64], %238 {strides = array<i32>} : memref<2x8x128xi32, #tpu.memory_space<vmem>>, vector<1x8x128xi32>,
    %c1_i32_65 = arith.constant 1 : i32
    %239 = arith.index_cast %c1_i32_65 : i32 to index
    %c0_66 = arith.constant 0 : index
    %c0_67 = arith.constant 0 : index
    %c0_68 = arith.constant 0 : index
    %240 = vector.load %arg3[%239, %c0_66, %c0_67, %c0_68] : memref<2x4x16x128xf32, #tpu.memory_space<vmem>>, vector<1x4x16x128xf32>
    %241 = vector.shape_cast %240 : vector<1x4x16x128xf32> to vector<4x16x128xf32>
    %c0_69 = arith.constant 0 : index
    %242 = memref.load %arg1[%c0_69] : memref<4xf32, #tpu.memory_space<smem>>
    %243 = vector.extract_strided_slice %241 {offsets = [0, 0, 0], sizes = [1, 16, 128], strides = [1, 1, 1]} : vector<4x16x128xf32> to vector<1x16x128xf32>
    %244 = vector.shape_cast %243 : vector<1x16x128xf32> to vector<16x128xf32>
    %245 = vector.broadcast %242 : f32 to vector<16x128xf32>
    %246 = arith.mulf %245, %244 : vector<16x128xf32>
    %c1_70 = arith.constant 1 : index
    %247 = memref.load %arg1[%c1_70] : memref<4xf32, #tpu.memory_space<smem>>
    %248 = vector.extract_strided_slice %241 {offsets = [1, 0, 0], sizes = [1, 16, 128], strides = [1, 1, 1]} : vector<4x16x128xf32> to vector<1x16x128xf32>
    %249 = vector.shape_cast %248 : vector<1x16x128xf32> to vector<16x128xf32>
    %250 = vector.broadcast %247 : f32 to vector<16x128xf32>
    %251 = arith.mulf %250, %249 : vector<16x128xf32>
    %252 = arith.addf %246, %251 : vector<16x128xf32>
    %c2_71 = arith.constant 2 : index
    %253 = memref.load %arg1[%c2_71] : memref<4xf32, #tpu.memory_space<smem>>
    %254 = vector.extract_strided_slice %241 {offsets = [2, 0, 0], sizes = [1, 16, 128], strides = [1, 1, 1]} : vector<4x16x128xf32> to vector<1x16x128xf32>
    %255 = vector.shape_cast %254 : vector<1x16x128xf32> to vector<16x128xf32>
    %256 = vector.broadcast %253 : f32 to vector<16x128xf32>
    %257 = arith.mulf %256, %255 : vector<16x128xf32>
    %258 = arith.addf %252, %257 : vector<16x128xf32>
    %c3_72 = arith.constant 3 : index
    %259 = memref.load %arg1[%c3_72] : memref<4xf32, #tpu.memory_space<smem>>
    %260 = vector.extract_strided_slice %241 {offsets = [3, 0, 0], sizes = [1, 16, 128], strides = [1, 1, 1]} : vector<4x16x128xf32> to vector<1x16x128xf32>
    %261 = vector.shape_cast %260 : vector<1x16x128xf32> to vector<16x128xf32>
    %262 = vector.broadcast %259 : f32 to vector<16x128xf32>
    %263 = arith.mulf %262, %261 : vector<16x128xf32>
    %264 = arith.addf %258, %263 : vector<16x128xf32>
    %c0_73 = arith.constant 0 : index
    %265 = memref.load %arg2[%c0_73] : memref<1xf32, #tpu.memory_space<smem>>
    %266 = vector.broadcast %265 : f32 to vector<16x128xf32>
    %267 = arith.addf %264, %266 : vector<16x128xf32>
    %268 = arith.index_cast %c1_i32_65 : i32 to index
    %c0_74 = arith.constant 0 : index
    %c0_75 = arith.constant 0 : index
    %269 = vector.load %arg4[%268, %c0_74, %c0_75] : memref<2x16x128xf32, #tpu.memory_space<vmem>>, vector<1x16x128xf32>
    %270 = vector.shape_cast %269 : vector<1x16x128xf32> to vector<16x128xf32>
    %271 = vector.shape_cast %267 : vector<16x128xf32> to vector<1x16x128xf32>
    tpu.vector_store %arg4[%268, %c0_74, %c0_75], %271 {strides = array<i32>} : memref<2x16x128xf32, #tpu.memory_space<vmem>>, vector<1x16x128xf32>,
    %c0_i32_76 = arith.constant 0 : i32
    %272 = vector.broadcast %c0_i32_76 : i32 to vector<16x128xi32>
    %273 = arith.cmpi eq, %3, %272 : vector<16x128xi32>
    %c1_i32_77 = arith.constant 1 : i32
    %274 = tpu.dynamic_rotate %267 by %c1_i32_77 dim 1 : vector<16x128xf32>, i32 -> vector<16x128xf32>
    %cst_78 = arith.constant 0xFF800000 : f32
    %275 = vector.broadcast %cst_78 : f32 to vector<16x128xf32>
    %276 = arith.select %273, %275, %274 : vector<16x128xi1>, vector<16x128xf32>
    %c7_i32_79 = arith.constant 7 : i32
    %277 = vector.broadcast %c7_i32_79 : i32 to vector<16x128xi32>
    %278 = arith.cmpi eq, %3, %277 : vector<16x128xi32>
    %c127_i32_80 = arith.constant 127 : i32
    %279 = tpu.dynamic_rotate %267 by %c127_i32_80 dim 1 : vector<16x128xf32>, i32 -> vector<16x128xf32>
    %cst_81 = arith.constant 0xFF800000 : f32
    %280 = vector.broadcast %cst_81 : f32 to vector<16x128xf32>
    %281 = arith.select %278, %280, %279 : vector<16x128xi1>, vector<16x128xf32>
    %282 = arith.maximumf %276, %281 : vector<16x128xf32>
    %283 = arith.maximumf %267, %282 : vector<16x128xf32>
    %c0_i32_82 = arith.constant 0 : i32
    %284 = vector.broadcast %c0_i32_82 : i32 to vector<16x128xi32>
    %285 = arith.cmpi eq, %5, %284 : vector<16x128xi32>
    %c8_i32_83 = arith.constant 8 : i32
    %286 = tpu.dynamic_rotate %283 by %c8_i32_83 dim 1 : vector<16x128xf32>, i32 -> vector<16x128xf32>
    %cst_84 = arith.constant 0xFF800000 : f32
    %287 = vector.broadcast %cst_84 : f32 to vector<16x128xf32>
    %288 = arith.select %285, %287, %286 : vector<16x128xi1>, vector<16x128xf32>
    %c15_i32_85 = arith.constant 15 : i32
    %289 = vector.broadcast %c15_i32_85 : i32 to vector<16x128xi32>
    %290 = arith.cmpi eq, %5, %289 : vector<16x128xi32>
    %c120_i32_86 = arith.constant 120 : i32
    %291 = tpu.dynamic_rotate %283 by %c120_i32_86 dim 1 : vector<16x128xf32>, i32 -> vector<16x128xf32>
    %cst_87 = arith.constant 0xFF800000 : f32
    %292 = vector.broadcast %cst_87 : f32 to vector<16x128xf32>
    %293 = arith.select %290, %292, %291 : vector<16x128xi1>, vector<16x128xf32>
    %294 = arith.maximumf %288, %293 : vector<16x128xf32>
    %295 = arith.maximumf %283, %294 : vector<16x128xf32>
    %c0_i32_88 = arith.constant 0 : i32
    %296 = vector.broadcast %c0_i32_88 : i32 to vector<16x128xi32>
    %297 = arith.cmpi eq, %1, %296 : vector<16x128xi32>
    %c1_i32_89 = arith.constant 1 : i32
    %298 = tpu.dynamic_rotate %295 by %c1_i32_89 dim 0 : vector<16x128xf32>, i32 -> vector<16x128xf32>
    %cst_90 = arith.constant 0xFF800000 : f32
    %299 = vector.broadcast %cst_90 : f32 to vector<16x128xf32>
    %300 = arith.select %297, %299, %298 : vector<16x128xi1>, vector<16x128xf32>
    %c15_i32_91 = arith.constant 15 : i32
    %301 = vector.broadcast %c15_i32_91 : i32 to vector<16x128xi32>
    %302 = arith.cmpi eq, %1, %301 : vector<16x128xi32>
    %c15_i32_92 = arith.constant 15 : i32
    %303 = tpu.dynamic_rotate %295 by %c15_i32_92 dim 0 : vector<16x128xf32>, i32 -> vector<16x128xf32>
    %cst_93 = arith.constant 0xFF800000 : f32
    %304 = vector.broadcast %cst_93 : f32 to vector<16x128xf32>
    %305 = arith.select %302, %304, %303 : vector<16x128xi1>, vector<16x128xf32>
    %306 = arith.maximumf %300, %305 : vector<16x128xf32>
    %307 = arith.maximumf %295, %306 : vector<16x128xf32>
    %308 = arith.cmpf oeq, %307, %267 : vector<16x128xf32>
    %cst_94 = arith.constant 0.000000e+00 : f32
    %309 = vector.broadcast %cst_94 : f32 to vector<16x128xf32>
    %310 = arith.select %308, %267, %309 : vector<16x128xi1>, vector<16x128xf32>
    %311 = tpu.bitcast %310 : vector<16x128xf32> -> vector<16x128xi32>
    %c0_i32_95 = arith.constant 0 : i32
    %312 = vector.broadcast %c0_i32_95 : i32 to vector<16x128xi32>
    %313 = arith.cmpi slt, %311, %312 : vector<16x128xi32>
    %c2147483647_i32_96 = arith.constant 2147483647 : i32
    %c0_i32_97 = arith.constant 0 : i32
    %314 = vector.broadcast %c2147483647_i32_96 : i32 to vector<16x128xi32>
    %315 = vector.broadcast %c0_i32_97 : i32 to vector<16x128xi32>
    %316 = arith.select %313, %314, %315 : vector<16x128xi1>, vector<16x128xi32>
    %317 = arith.xori %311, %316 : vector<16x128xi32>
    %c-2048_i32_98 = arith.constant -2048 : i32
    %318 = vector.broadcast %c-2048_i32_98 : i32 to vector<16x128xi32>
    %319 = arith.andi %317, %318 : vector<16x128xi32>
    %320 = arith.ori %319, %10 : vector<16x128xi32>
    %321 = vector.shape_cast %320 : vector<16x128xi32> to vector<1x16x128xi32>
    %cst_99 = arith.constant dense<-2147483648> : vector<1xi32>
    %322 = vector.multi_reduction <maxsi>, %321, %cst_99 [1, 2] : vector<1x16x128xi32> to vector<1xi32>
    %323 = vector.shape_cast %322 : vector<1xi32> to vector<1x1x1xi32>
    %324 = vector.extract %323[0, 0, 0] : i32 from vector<1x1x1xi32>
    %325 = vector.broadcast %324 : i32 to vector<16x128xi32>
    %326 = arith.cmpi eq, %320, %325 : vector<16x128xi32>
    %c-2147483648_i32_100 = arith.constant -2147483648 : i32
    %327 = vector.broadcast %c-2147483648_i32_100 : i32 to vector<16x128xi32>
    %328 = arith.select %326, %327, %320 : vector<16x128xi1>, vector<16x128xi32>
    %329 = vector.shape_cast %328 : vector<16x128xi32> to vector<1x16x128xi32>
    %cst_101 = arith.constant dense<-2147483648> : vector<1xi32>
    %330 = vector.multi_reduction <maxsi>, %329, %cst_101 [1, 2] : vector<1x16x128xi32> to vector<1xi32>
    %331 = vector.shape_cast %330 : vector<1xi32> to vector<1x1x1xi32>
    %332 = vector.extract %331[0, 0, 0] : i32 from vector<1x1x1xi32>
    %333 = vector.broadcast %332 : i32 to vector<16x128xi32>
    %334 = arith.cmpi eq, %328, %333 : vector<16x128xi32>
    %c-2147483648_i32_102 = arith.constant -2147483648 : i32
    %335 = vector.broadcast %c-2147483648_i32_102 : i32 to vector<16x128xi32>
    %336 = arith.select %334, %335, %328 : vector<16x128xi1>, vector<16x128xi32>
    %337 = vector.shape_cast %336 : vector<16x128xi32> to vector<1x16x128xi32>
    %cst_103 = arith.constant dense<-2147483648> : vector<1xi32>
    %338 = vector.multi_reduction <maxsi>, %337, %cst_103 [1, 2] : vector<1x16x128xi32> to vector<1xi32>
    %339 = vector.shape_cast %338 : vector<1xi32> to vector<1x1x1xi32>
    %340 = vector.extract %339[0, 0, 0] : i32 from vector<1x1x1xi32>
    %341 = vector.broadcast %340 : i32 to vector<16x128xi32>
    %342 = arith.cmpi eq, %336, %341 : vector<16x128xi32>
    %c-2147483648_i32_104 = arith.constant -2147483648 : i32
    %343 = vector.broadcast %c-2147483648_i32_104 : i32 to vector<16x128xi32>
    %344 = arith.select %342, %343, %336 : vector<16x128xi1>, vector<16x128xi32>
    %345 = vector.shape_cast %344 : vector<16x128xi32> to vector<1x16x128xi32>
    %cst_105 = arith.constant dense<-2147483648> : vector<1xi32>
    %346 = vector.multi_reduction <maxsi>, %345, %cst_105 [1, 2] : vector<1x16x128xi32> to vector<1xi32>
    %347 = vector.shape_cast %346 : vector<1xi32> to vector<1x1x1xi32>
    %348 = vector.extract %347[0, 0, 0] : i32 from vector<1x1x1xi32>
    %349 = vector.broadcast %348 : i32 to vector<16x128xi32>
    %350 = arith.cmpi eq, %344, %349 : vector<16x128xi32>
    %c-2147483648_i32_106 = arith.constant -2147483648 : i32
    %351 = vector.broadcast %c-2147483648_i32_106 : i32 to vector<16x128xi32>
    %352 = arith.select %350, %351, %344 : vector<16x128xi1>, vector<16x128xi32>
    %353 = vector.shape_cast %352 : vector<16x128xi32> to vector<1x16x128xi32>
    %cst_107 = arith.constant dense<-2147483648> : vector<1xi32>
    %354 = vector.multi_reduction <maxsi>, %353, %cst_107 [1, 2] : vector<1x16x128xi32> to vector<1xi32>
    %355 = vector.shape_cast %354 : vector<1xi32> to vector<1x1x1xi32>
    %356 = vector.extract %355[0, 0, 0] : i32 from vector<1x1x1xi32>
    %cst_108 = arith.constant 0.000000e+00 : f32
    %357 = vector.broadcast %cst_108 : f32 to vector<1x128xf32>
    %c0_i32_109 = arith.constant 0 : i32
    %358 = vector.broadcast %c0_i32_109 : i32 to vector<1x128xi32>
    %c2047_i32_110 = arith.constant 2047 : i32
    %359 = arith.andi %324, %c2047_i32_110 : i32
    %c2047_i32_111 = arith.constant 2047 : i32
    %360 = arith.subi %c2047_i32_111, %359 : i32
    %361 = vector.broadcast %360 : i32 to vector<16x128xi32>
    %362 = arith.cmpi eq, %8, %361 : vector<16x128xi32>
    %cst_112 = arith.constant 0xFF800000 : f32
    %363 = vector.broadcast %cst_112 : f32 to vector<16x128xf32>
    %364 = arith.select %362, %310, %363 : vector<16x128xi1>, vector<16x128xf32>
    %365 = vector.shape_cast %364 : vector<16x128xf32> to vector<1x16x128xf32>
    %cst_113 = arith.constant dense<0xFF800000> : vector<1xf32>
    %366 = vector.multi_reduction <maximumf>, %365, %cst_113 [1, 2] : vector<1x16x128xf32> to vector<1xf32>
    %367 = vector.shape_cast %366 : vector<1xf32> to vector<1x1x1xf32>
    %368 = vector.extract %367[0, 0, 0] : f32 from vector<1x1x1xf32>
    %c0_i32_114 = arith.constant 0 : i32
    %369 = vector.broadcast %c0_i32_114 : i32 to vector<1x128xi32>
    %370 = arith.cmpi eq, %11, %369 : vector<1x128xi32>
    %371 = vector.broadcast %368 : f32 to vector<1x128xf32>
    %372 = arith.select %370, %371, %357 : vector<1x128xi1>, vector<1x128xf32>
    %c0_i32_115 = arith.constant 0 : i32
    %373 = vector.broadcast %c0_i32_115 : i32 to vector<1x128xi32>
    %374 = arith.cmpi eq, %11, %373 : vector<1x128xi32>
    %375 = vector.broadcast %360 : i32 to vector<1x128xi32>
    %376 = arith.select %374, %375, %358 : vector<1x128xi1>, vector<1x128xi32>
    %c2047_i32_116 = arith.constant 2047 : i32
    %377 = arith.andi %332, %c2047_i32_116 : i32
    %c2047_i32_117 = arith.constant 2047 : i32
    %378 = arith.subi %c2047_i32_117, %377 : i32
    %379 = vector.broadcast %378 : i32 to vector<16x128xi32>
    %380 = arith.cmpi eq, %8, %379 : vector<16x128xi32>
    %cst_118 = arith.constant 0xFF800000 : f32
    %381 = vector.broadcast %cst_118 : f32 to vector<16x128xf32>
    %382 = arith.select %380, %310, %381 : vector<16x128xi1>, vector<16x128xf32>
    %383 = vector.shape_cast %382 : vector<16x128xf32> to vector<1x16x128xf32>
    %cst_119 = arith.constant dense<0xFF800000> : vector<1xf32>
    %384 = vector.multi_reduction <maximumf>, %383, %cst_119 [1, 2] : vector<1x16x128xf32> to vector<1xf32>
    %385 = vector.shape_cast %384 : vector<1xf32> to vector<1x1x1xf32>
    %386 = vector.extract %385[0, 0, 0] : f32 from vector<1x1x1xf32>
    %c1_i32_120 = arith.constant 1 : i32
    %387 = vector.broadcast %c1_i32_120 : i32 to vector<1x128xi32>
    %388 = arith.cmpi eq, %11, %387 : vector<1x128xi32>
    %389 = vector.broadcast %386 : f32 to vector<1x128xf32>
    %390 = arith.select %388, %389, %372 : vector<1x128xi1>, vector<1x128xf32>
    %c1_i32_121 = arith.constant 1 : i32
    %391 = vector.broadcast %c1_i32_121 : i32 to vector<1x128xi32>
    %392 = arith.cmpi eq, %11, %391 : vector<1x128xi32>
    %393 = vector.broadcast %378 : i32 to vector<1x128xi32>
    %394 = arith.select %392, %393, %376 : vector<1x128xi1>, vector<1x128xi32>
    %c2047_i32_122 = arith.constant 2047 : i32
    %395 = arith.andi %340, %c2047_i32_122 : i32
    %c2047_i32_123 = arith.constant 2047 : i32
    %396 = arith.subi %c2047_i32_123, %395 : i32
    %397 = vector.broadcast %396 : i32 to vector<16x128xi32>
    %398 = arith.cmpi eq, %8, %397 : vector<16x128xi32>
    %cst_124 = arith.constant 0xFF800000 : f32
    %399 = vector.broadcast %cst_124 : f32 to vector<16x128xf32>
    %400 = arith.select %398, %310, %399 : vector<16x128xi1>, vector<16x128xf32>
    %401 = vector.shape_cast %400 : vector<16x128xf32> to vector<1x16x128xf32>
    %cst_125 = arith.constant dense<0xFF800000> : vector<1xf32>
    %402 = vector.multi_reduction <maximumf>, %401, %cst_125 [1, 2] : vector<1x16x128xf32> to vector<1xf32>
    %403 = vector.shape_cast %402 : vector<1xf32> to vector<1x1x1xf32>
    %404 = vector.extract %403[0, 0, 0] : f32 from vector<1x1x1xf32>
    %c2_i32_126 = arith.constant 2 : i32
    %405 = vector.broadcast %c2_i32_126 : i32 to vector<1x128xi32>
    %406 = arith.cmpi eq, %11, %405 : vector<1x128xi32>
    %407 = vector.broadcast %404 : f32 to vector<1x128xf32>
    %408 = arith.select %406, %407, %390 : vector<1x128xi1>, vector<1x128xf32>
    %c2_i32_127 = arith.constant 2 : i32
    %409 = vector.broadcast %c2_i32_127 : i32 to vector<1x128xi32>
    %410 = arith.cmpi eq, %11, %409 : vector<1x128xi32>
    %411 = vector.broadcast %396 : i32 to vector<1x128xi32>
    %412 = arith.select %410, %411, %394 : vector<1x128xi1>, vector<1x128xi32>
    %c2047_i32_128 = arith.constant 2047 : i32
    %413 = arith.andi %348, %c2047_i32_128 : i32
    %c2047_i32_129 = arith.constant 2047 : i32
    %414 = arith.subi %c2047_i32_129, %413 : i32
    %415 = vector.broadcast %414 : i32 to vector<16x128xi32>
    %416 = arith.cmpi eq, %8, %415 : vector<16x128xi32>
    %cst_130 = arith.constant 0xFF800000 : f32
    %417 = vector.broadcast %cst_130 : f32 to vector<16x128xf32>
    %418 = arith.select %416, %310, %417 : vector<16x128xi1>, vector<16x128xf32>
    %419 = vector.shape_cast %418 : vector<16x128xf32> to vector<1x16x128xf32>
    %cst_131 = arith.constant dense<0xFF800000> : vector<1xf32>
    %420 = vector.multi_reduction <maximumf>, %419, %cst_131 [1, 2] : vector<1x16x128xf32> to vector<1xf32>
    %421 = vector.shape_cast %420 : vector<1xf32> to vector<1x1x1xf32>
    %422 = vector.extract %421[0, 0, 0] : f32 from vector<1x1x1xf32>
    %c3_i32_132 = arith.constant 3 : i32
    %423 = vector.broadcast %c3_i32_132 : i32 to vector<1x128xi32>
    %424 = arith.cmpi eq, %11, %423 : vector<1x128xi32>
    %425 = vector.broadcast %422 : f32 to vector<1x128xf32>
    %426 = arith.select %424, %425, %408 : vector<1x128xi1>, vector<1x128xf32>
    %c3_i32_133 = arith.constant 3 : i32
    %427 = vector.broadcast %c3_i32_133 : i32 to vector<1x128xi32>
    %428 = arith.cmpi eq, %11, %427 : vector<1x128xi32>
    %429 = vector.broadcast %414 : i32 to vector<1x128xi32>
    %430 = arith.select %428, %429, %412 : vector<1x128xi1>, vector<1x128xi32>
    %c2047_i32_134 = arith.constant 2047 : i32
    %431 = arith.andi %356, %c2047_i32_134 : i32
    %c2047_i32_135 = arith.constant 2047 : i32
    %432 = arith.subi %c2047_i32_135, %431 : i32
    %433 = vector.broadcast %432 : i32 to vector<16x128xi32>
    %434 = arith.cmpi eq, %8, %433 : vector<16x128xi32>
    %cst_136 = arith.constant 0xFF800000 : f32
    %435 = vector.broadcast %cst_136 : f32 to vector<16x128xf32>
    %436 = arith.select %434, %310, %435 : vector<16x128xi1>, vector<16x128xf32>
    %437 = vector.shape_cast %436 : vector<16x128xf32> to vector<1x16x128xf32>
    %cst_137 = arith.constant dense<0xFF800000> : vector<1xf32>
    %438 = vector.multi_reduction <maximumf>, %437, %cst_137 [1, 2] : vector<1x16x128xf32> to vector<1xf32>
    %439 = vector.shape_cast %438 : vector<1xf32> to vector<1x1x1xf32>
    %440 = vector.extract %439[0, 0, 0] : f32 from vector<1x1x1xf32>
    %c4_i32_138 = arith.constant 4 : i32
    %441 = vector.broadcast %c4_i32_138 : i32 to vector<1x128xi32>
    %442 = arith.cmpi eq, %11, %441 : vector<1x128xi32>
    %443 = vector.broadcast %440 : f32 to vector<1x128xf32>
    %444 = arith.select %442, %443, %426 : vector<1x128xi1>, vector<1x128xf32>
    %c4_i32_139 = arith.constant 4 : i32
    %445 = vector.broadcast %c4_i32_139 : i32 to vector<1x128xi32>
    %446 = arith.cmpi eq, %11, %445 : vector<1x128xi32>
    %447 = vector.broadcast %432 : i32 to vector<1x128xi32>
    %448 = arith.select %446, %447, %430 : vector<1x128xi1>, vector<1x128xi32>
    %c0_i32_140 = arith.constant 0 : i32
    %449 = vector.broadcast %c0_i32_140 : i32 to vector<8x128xi32>
    %450 = arith.cmpi eq, %12, %449 : vector<8x128xi32>
    %451 = tpu.bitcast %444 : vector<1x128xf32> -> vector<1x128xi32>
    %452 = vector.shape_cast %451 : vector<1x128xi32> to vector<1x128xi32>
    %453 = vector.broadcast %452 : vector<1x128xi32> to vector<8x128xi32>
    %c1_i32_141 = arith.constant 1 : i32
    %454 = vector.broadcast %c1_i32_141 : i32 to vector<8x128xi32>
    %455 = arith.cmpi eq, %12, %454 : vector<8x128xi32>
    %456 = vector.shape_cast %448 : vector<1x128xi32> to vector<1x128xi32>
    %457 = vector.broadcast %456 : vector<1x128xi32> to vector<8x128xi32>
    %458 = arith.select %455, %457, %13 : vector<8x128xi1>, vector<8x128xi32>
    %459 = arith.select %450, %453, %458 : vector<8x128xi1>, vector<8x128xi32>
    %460 = arith.index_cast %c1_i32_65 : i32 to index
    %c0_142 = arith.constant 0 : index
    %c0_143 = arith.constant 0 : index
    %461 = vector.load %arg5[%460, %c0_142, %c0_143] : memref<2x8x128xi32, #tpu.memory_space<vmem>>, vector<1x8x128xi32>
    %462 = vector.shape_cast %461 : vector<1x8x128xi32> to vector<8x128xi32>
    %463 = vector.shape_cast %459 : vector<8x128xi32> to vector<1x8x128xi32>
    tpu.vector_store %arg5[%460, %c0_142, %c0_143], %463 {strides = array<i32>} : memref<2x8x128xi32, #tpu.memory_space<vmem>>, vector<1x8x128xi32>,
    %c2_i32_144 = arith.constant 2 : i32
    return
  }
  func.func @transform_0(%arg0: i32) -> i32 {
    %c0_i32 = arith.constant 0 : i32
    %c0_i32_0 = arith.constant 0 : i32
    return %c0_i32 : i32
  }
  func.func @transform_1(%arg0: i32) -> i32 {
    %c0_i32 = arith.constant 0 : i32
    %c0_i32_0 = arith.constant 0 : i32
    return %c0_i32 : i32
  }
  func.func @transform_2(%arg0: i32) -> (i32, i32, i32, i32) {
    %c0_i32 = arith.constant 0 : i32
    %c0_i32_0 = arith.constant 0 : i32
    %c0_i32_1 = arith.constant 0 : i32
    %c0_i32_2 = arith.constant 0 : i32
    return %arg0, %c0_i32, %c0_i32_0, %c0_i32_1 : i32, i32, i32, i32
  }
  func.func @transform_3(%arg0: i32) -> (i32, i32, i32) {
    %c0_i32 = arith.constant 0 : i32
    %c0_i32_0 = arith.constant 0 : i32
    %c0_i32_1 = arith.constant 0 : i32
    return %arg0, %c0_i32, %c0_i32_0 : i32, i32, i32
  }
  func.func @transform_4(%arg0: i32) -> (i32, i32, i32) {
    %c0_i32 = arith.constant 0 : i32
    %c0_i32_0 = arith.constant 0 : i32
    %c0_i32_1 = arith.constant 0 : i32
    return %arg0, %c0_i32, %c0_i32_0 : i32, i32, i32
  }
}

</mosaic_0001>

<llo_original>
// kernel: cuboid_proposal_net_forward.1
$region0: #{cuboid_proposal_net_forward.1}
  #allocation0 [shape = 'u32[]', space=smem, size = 0x4, offset = 0x4, fixed_abs, tag = 'smem constant byte address 0x4 - core index']
  #allocation1 [shape = 'u32[72,128]{1,0:T(1,128)}', space=vmem, size = 0x9000, scoped, tag = 'internal scratch']
  #allocation2 [shape = 'f32[1]{0:T(128)S(6)}', space=smem, size = 0x200, scoped, tag = 'scoped memory for cuboid_proposal_net_forward.1']
  %s0 = inlined_call_operand.vmem [shape: f32[4], index: 0, kind: input, shape index: {}]
  %s1 = inlined_call_operand.<no memory space> [shape: f32[1], index: 1, kind: input, shape index: {}]
  %s2 = inlined_call_operand.vmem [shape: f32[4,4,16,128], index: 2, kind: input, shape index: {}]
  %s3 = inlined_call_operand.vmem [shape: f32[4,16,128], index: 3, kind: output, shape index: {0}]
  %s4 = inlined_call_operand.vmem [shape: s32[4,8,128], index: 4, kind: output, shape index: {1}]
  %5 = xla_tuple %s3, %s4
  %s6 = sld [smem:[#allocation0]]
  $region57: #{cuboid_proposal_net_forward.1} parent=0
    _
  %s8 = ssub.s32 1, %s6
  %s9 = scalar_select 0, %s8, %s6
  %10 = sst [smem:[#allocation2]] %s1
  $region1: #{cuboid_proposal_net_forward.1} parent=0
    #allocation3 [shape = 'u8[512]{0}', space=smem, size = 0x200, scoped, tag = 'input window, operand 0, single buffered']
    #allocation4 [shape = 's32[2]{0}', space=sflag, size = 0x8, scoped, tag = 'scoped memory for cuboid_proposal_net_forward.1']
    %11 = vsyncpa [#allocation4], 0
    loop: start=0, step=1, limit=4
    $region2: #{cuboid_proposal_net_forward.1} parent=1 // loop_pre_header
      _
    $region3: #{cuboid_proposal_net_forward.1} parent=1 // loop_header
      %s13 = sphi 0, %s17
      %p14 = scmp.ge.s32.totalorder %s13, 4
      %s21 = sphi 0, %s21
      %s23 = sphi 0, %s21
      %s24 = sphi 0, %s23
      %s38 = sphi 0, %s24
      %s42 = sphi 0, %s42
      %s44 = sphi 0, %s42
      %s45 = sphi 0, %s44
      %s59 = sphi 0, %s45
      %s65 = sphi 0, %s67
      %s68 = sphi 0, %s65
      %s69 = sphi 0, %s68
      %s85 = sphi 0, %s69
      %s91 = sphi 0, %s93
      %s94 = sphi 0, %s91
      %s95 = sphi 0, %s94
      %s111 = sphi 0, %s95
      %s117 = sphi 0, %s119
      %s120 = sphi 0, %s117
      %s121 = sphi 0, %s120
      %s137 = sphi 0, %s121
    $region4: #{cuboid_proposal_net_forward.1} parent=1 // loop_header_branch
      %16 = sbr.rel (%p14) target = $region8
    $region5: #{cuboid_proposal_net_forward.1} parent=1 // loop_body
      %s18 = ssub.s32 %s13, 1
      %s19 = ssub.s32 %s13, 2
      %s20 = sadd.s32 %s13, 1
      %s22 = sadd.s32 %s21, 1
      %p25 = scmp.eq.s32.totalorder %s13, 1
      %p26 = scmp.ne.s32.totalorder %s21, %s23
      %p27 = scmp.eq.s32.totalorder %s13, 0
      %p28 = por %p26, %p27
      %p29 = scmp.ne.s32.totalorder %s21, %s23
      %p30 = scmp.eq.s32.totalorder %s18, 1
      %p31 = por %p29, %p30
      %p32 = scmp.ne.s32.totalorder %s23, %s24
      %p33 = scmp.eq.s32.totalorder %s18, 0
      %p34 = por %p32, %p33
      %p35 = scmp.ne.s32.totalorder %s23, %s24
      %p36 = scmp.eq.s32.totalorder %s19, 1
      %p37 = por %p35, %p36
      %p39 = scmp.ne.s32.totalorder %s24, %s38
      %p40 = scmp.eq.s32.totalorder %s19, 0
      %p41 = por %p39, %p40
      %s43 = sadd.s32 %s42, 1
      %p46 = scmp.eq.s32.totalorder %s13, 1
      %p47 = scmp.ne.s32.totalorder %s42, %s44
      %p48 = scmp.eq.s32.totalorder %s13, 0
      %p49 = por %p47, %p48
      %p50 = scmp.ne.s32.totalorder %s42, %s44
      %p51 = scmp.eq.s32.totalorder %s18, 1
      %p52 = por %p50, %p51
      %p53 = scmp.ne.s32.totalorder %s44, %s45
      %p54 = scmp.eq.s32.totalorder %s18, 0
      %p55 = por %p53, %p54
      %p56 = scmp.ne.s32.totalorder %s44, %s45
      %p57 = scmp.eq.s32.totalorder %s19, 1
      %p58 = por %p56, %p57
      %p60 = scmp.ne.s32.totalorder %s45, %s59
      %p61 = scmp.eq.s32.totalorder %s19, 0
      %p62 = por %p60, %p61
      %s63 = ssub.s32 %s13, %s20
      %p64 = scmp.eq.s32.totalorder %s63, 0
      %s66 = sadd.s32 %s65, 1
      %s67 = scalar_select %p64, %s65, %s66
      %p70 = pneg %p64
      %p71 = scmp.eq.s32.totalorder %s13, 1
      %p72 = por %p70, %p71
      %p73 = scmp.ne.s32.totalorder %s65, %s68
      %p74 = scmp.eq.s32.totalorder %s13, 0
      %p75 = por %p73, %p74
      %p76 = scmp.ne.s32.totalorder %s65, %s68
      %p77 = scmp.eq.s32.totalorder %s18, 1
      %p78 = por %p76, %p77
      %p79 = scmp.ne.s32.totalorder %s68, %s69
      %p80 = scmp.eq.s32.totalorder %s18, 0
      %p81 = por %p79, %p80
      %p82 = scmp.ne.s32.totalorder %s68, %s69
      %p83 = scmp.eq.s32.totalorder %s19, 1
      %p84 = por %p82, %p83
      %p86 = scmp.ne.s32.totalorder %s69, %s85
      %p87 = scmp.eq.s32.totalorder %s19, 0
      %p88 = por %p86, %p87
      %s89 = ssub.s32 %s13, %s20
      %p90 = scmp.eq.s32.totalorder %s89, 0
      %s92 = sadd.s32 %s91, 1
      %s93 = scalar_select %p90, %s91, %s92
      %p96 = pneg %p90
      %p97 = scmp.eq.s32.totalorder %s13, 1
      %p98 = por %p96, %p97
      %p99 = scmp.ne.s32.totalorder %s91, %s94
      %p100 = scmp.eq.s32.totalorder %s13, 0
      %p101 = por %p99, %p100
      %p102 = scmp.ne.s32.totalorder %s91, %s94
      %p103 = scmp.eq.s32.totalorder %s18, 1
      %p104 = por %p102, %p103
      %p105 = scmp.ne.s32.totalorder %s94, %s95
      %p106 = scmp.eq.s32.totalorder %s18, 0
      %p107 = por %p105, %p106
      %p108 = scmp.ne.s32.totalorder %s94, %s95
      %p109 = scmp.eq.s32.totalorder %s19, 1
      %p110 = por %p108, %p109
      %p112 = scmp.ne.s32.totalorder %s95, %s111
      %p113 = scmp.eq.s32.totalorder %s19, 0
      %p114 = por %p112, %p113
      %s115 = ssub.s32 %s13, %s20
      %p116 = scmp.eq.s32.totalorder %s115, 0
      %s118 = sadd.s32 %s117, 1
      %s119 = scalar_select %p116, %s117, %s118
      %p122 = pneg %p116
      %p123 = scmp.eq.s32.totalorder %s13, 1
      %p124 = por %p122, %p123
      %p125 = scmp.ne.s32.totalorder %s117, %s120
      %p126 = scmp.eq.s32.totalorder %s13, 0
      %p127 = por %p125, %p126
      %p128 = scmp.ne.s32.totalorder %s117, %s120
      %p129 = scmp.eq.s32.totalorder %s18, 1
      %p130 = por %p128, %p129
      %p131 = scmp.ne.s32.totalorder %s120, %s121
      %p132 = scmp.eq.s32.totalorder %s18, 0
      %p133 = por %p131, %p132
      %p134 = scmp.ne.s32.totalorder %s120, %s121
      %p135 = scmp.eq.s32.totalorder %s19, 1
      %p136 = por %p134, %p135
      %p138 = scmp.ne.s32.totalorder %s121, %s137
      %p139 = scmp.eq.s32.totalorder %s19, 0
      %p140 = por %p138, %p139
      %p141 = scmp.le.s32.totalorder 1, %s13
      %p142 = scmp.lt.s32.totalorder %s13, 3
      %p143 = pnand %p141, %p142
      %p144 = pneg %p143
      // Predicated region
      $region9: #{cuboid_proposal_net_forward.1} parent=5 // pred_check
        _
      $region10: #{cuboid_proposal_net_forward.1} parent=5 // pred_check_branch
        %146 = sbr.rel (%p143) target = $region12
      $region11: #{cuboid_proposal_net_forward.1} parent=5 // pred_region
        %s147 = ssub.s32 %s13, 1
        // Predicated region
        $region13: #{cuboid_proposal_net_forward.1} parent=11 // pred_check
          %p148 = pneg %p34
        $region14: #{cuboid_proposal_net_forward.1} parent=11 // pred_check_branch
          %150 = sbr.rel (%p148) target = $region16
        $region15: #{cuboid_proposal_net_forward.1} parent=11 // pred_region
          %152 = vsyncadd [#allocation4], 0
          %s154 = sshll.u32 %s0, 4
          %s155 = int_to_ptr.vmem [resolvable:$true] %s154
          %157 = dma.vmem_to_smem %s155, 16, [#allocation3], [#allocation4]
        $region16: #{cuboid_proposal_net_forward.1} parent=11 // pred_fallthru
          _
        // Predicated region
        $region17: #{cuboid_proposal_net_forward.1} parent=11 // pred_check
          %p158 = pneg %p55
        $region18: #{cuboid_proposal_net_forward.1} parent=11 // pred_check_branch
          %160 = sbr.rel (%p158) target = $region20
        $region19: #{cuboid_proposal_net_forward.1} parent=11 // pred_region
          _
        $region20: #{cuboid_proposal_net_forward.1} parent=11 // pred_fallthru
          _
      $region12: #{cuboid_proposal_net_forward.1} parent=5 // pred_fallthru
        _
      %p161 = scmp.lt.s32.totalorder %s13, 2
      // Predicated region
      $region21: #{cuboid_proposal_net_forward.1} parent=5 // pred_check
        %p162 = pneg %p161
      $region22: #{cuboid_proposal_net_forward.1} parent=5 // pred_check_branch
        %164 = sbr.rel (%p162) target = $region24
      $region23: #{cuboid_proposal_net_forward.1} parent=5 // pred_region
        // Predicated region
        $region25: #{cuboid_proposal_net_forward.1} parent=23 // pred_check
          %p165 = pneg %p75
        $region26: #{cuboid_proposal_net_forward.1} parent=23 // pred_check_branch
          %167 = sbr.rel (%p165) target = $region28
        $region27: #{cuboid_proposal_net_forward.1} parent=23 // pred_region
          %s168 = smul.u32 2, %s13
          %p169 = scmp.lt.s32.totalorder %s168, 3
          %s170 = scalar_select %p169, %s168, 3
          %s171 = smul.addr %s170, 8
          %s172 = smul.addr %s171, 8
          %s173 = scalar_lea.vmem %s2, %s172
          %s174 = smul.u32 2, %s13
        $region28: #{cuboid_proposal_net_forward.1} parent=23 // pred_fallthru
          _
      $region24: #{cuboid_proposal_net_forward.1} parent=5 // pred_fallthru
        _
      %p175 = scmp.le.s32.totalorder 1, %s13
      %p176 = scmp.lt.s32.totalorder %s13, 3
      %p177 = pnand %p175, %p176
      %p178 = pneg %p177
      // Predicated region
      $region29: #{cuboid_proposal_net_forward.1} parent=5 // pred_check
        _
      $region30: #{cuboid_proposal_net_forward.1} parent=5 // pred_check_branch
        %180 = sbr.rel (%p177) target = $region32
      $region31: #{cuboid_proposal_net_forward.1} parent=5 // pred_region
        %s181 = ssub.s32 %s13, 1
        // Predicated region
        $region33: #{cuboid_proposal_net_forward.1} parent=31 // pred_check
          %p182 = pneg %p34
        $region34: #{cuboid_proposal_net_forward.1} parent=31 // pred_check_branch
          %184 = sbr.rel (%p182) target = $region36
        $region35: #{cuboid_proposal_net_forward.1} parent=31 // pred_region
          %186 = dma.done [#allocation4], 16
        $region36: #{cuboid_proposal_net_forward.1} parent=31 // pred_fallthru
          _
        %187 = sfence
        %p188 = pneg %p34
        %p189 = pneg %p31
        %p190 = pneg %p55
        %p191 = pneg %p52
        %s192 = smul.u32 2, %s18
        %p193 = scmp.lt.s32.totalorder %s192, 3
        %s194 = scalar_select %p193, %s192, 3
        %s195 = smul.addr %s194, 8
        %s196 = smul.addr %s195, 8
        %s197 = scalar_lea.vmem %s2, %s196
        %p198 = pneg %p81
        %p199 = pneg %p78
        %p200 = pneg %p107
        %p201 = pneg %p104
        %s202 = smul.u32 2, %s18
        %p203 = scmp.lt.s32.totalorder %s202, 3
        %s204 = scalar_select %p203, %s202, 3
        %s205 = smul.addr %s204, 2
        %s206 = smul.addr %s205, 8
        %s207 = scalar_lea.vmem %s3, %s206
        %p208 = pneg %p133
        %p209 = pneg %p130
        %s210 = smul.u32 2, %s18
        %p211 = scmp.lt.s32.totalorder %s210, 3
        %s212 = scalar_select %p211, %s210, 3
        %s213 = smul.addr %s212, 8
        %s214 = scalar_lea.vmem %s4, %s213
        %s215 = smul.u32 2, %s18
        %p216 = scmp.lt.s32.totalorder %s215, 3
        %s217 = scalar_select %p216, %s215, 3
        %s218 = smul.addr %s217, 8
        %s219 = smul.addr %s218, 8
        %s220 = scalar_lea.vmem %s2, %s219
        %s221 = smul.u32 2, %s18
        %s222 = smul.u32 2, %s18
        %p223 = scmp.lt.s32.totalorder %s222, 3
        %s224 = scalar_select %p223, %s222, 3
        %s225 = smul.addr %s224, 2
        %s226 = smul.addr %s225, 8
        %s227 = scalar_lea.vmem %s3, %s226
        %s228 = smul.u32 2, %s18
        %s229 = smul.u32 2, %s18
        %p230 = scmp.lt.s32.totalorder %s229, 3
        %s231 = scalar_select %p230, %s229, 3
        %s232 = smul.addr %s231, 8
        %s233 = scalar_lea.vmem %s4, %s232
        %s234 = smul.u32 2, %s18
        %v235 = vlaneseq
        %v236 = vand.u32 %v235, 127
        %v237 = vlaneseq
        %v238 = vshrl.u32 %v237, 7
        %v239 = vadd.s32 %v238, 8
        %v240 = vand.u32 %v236, 7
        %v241 = vshra.s32 %v236, 3
        %v242 = vshll.u32 %v238, 7
        %v243 = vshll.u32 %v239, 7
        %v244 = vor.u32 %v242, %v236
        %v245 = vor.u32 %v243, %v236
        %v246 = vsub.s32 2047, %v244
        %v247 = vsub.s32 2047, %v245
        %v248 = vld [vmem:[%s220] sm:$0xff]
        %v249 = vld [vmem:[%s220 + $0x8] sm:$0xff]
        %v250 = vld [vmem:[%s220 + $0x10] sm:$0xff]
        %v251 = vld [vmem:[%s220 + $0x18] sm:$0xff]
        %v252 = vld [vmem:[%s220 + $0x20] sm:$0xff]
        %v253 = vld [vmem:[%s220 + $0x28] sm:$0xff]
        %v254 = vld [vmem:[%s220 + $0x30] sm:$0xff]
        %v255 = vld [vmem:[%s220 + $0x38] sm:$0xff]
        %s256 = sld [smem:[#allocation3]]
        %v257 = vstv %s256
        %v258 = vmul.f32 %v257, %v248
        %v259 = vmul.f32 %v257, %v249
        %s260 = sld [smem:[#allocation3 + $0x1]]
        %v261 = vstv %s260
        %v262 = vmul.f32 %v261, %v250
        %v263 = vmul.f32 %v261, %v251
        %v264 = vadd.f32 %v258, %v262
        %v265 = vadd.f32 %v259, %v263
        %s266 = sld [smem:[#allocation3 + $0x2]]
        %v267 = vstv %s266
        %v268 = vmul.f32 %v267, %v252
        %v269 = vmul.f32 %v267, %v253
        %v270 = vadd.f32 %v264, %v268
        %v271 = vadd.f32 %v265, %v269
        %s272 = sld [smem:[#allocation3 + $0x3]]
        %v273 = vstv %s272
        %v274 = vmul.f32 %v273, %v254
        %v275 = vmul.f32 %v273, %v255
        %v276 = vadd.f32 %v270, %v274
        %v277 = vadd.f32 %v271, %v275
        %s278 = sld [smem:[#allocation2]]
        %v279 = vstv %s278
        %v280 = vadd.f32 %v276, %v279
        %v281 = vadd.f32 %v277, %v279
        %282 = vst [vmem:[%s227] sm:$0xff] %v280
        %283 = vst [vmem:[%s227 + $0x8] sm:$0xff] %v281
        %vm284 = vcmp.eq.s32.totalorder %v240, 0
        %285 = vrot.lane.b32.xlu0 %v280, 1
        %v286 = vpop.permute.xlu0 %285
        %287 = vrot.lane.b32.xlu0 %v281, 1
        %v288 = vpop.permute.xlu0 %287
        %v289 = vsel %vm284, -inf, %v286
        %v290 = vsel %vm284, -inf, %v288
        %vm291 = vcmp.eq.s32.totalorder %v240, 7
        %292 = vrot.lane.b32.xlu0 %v280, 127
        %v293 = vpop.permute.xlu0 %292
        %294 = vrot.lane.b32.xlu0 %v281, 127
        %v295 = vpop.permute.xlu0 %294
        %v296 = vsel %vm291, -inf, %v293
        %v297 = vsel %vm291, -inf, %v295
        %v298 = vmax.f32 %v289, %v296
        %v299 = vmax.f32 %v290, %v297
        %v300 = vmax.f32 %v280, %v298
        %v301 = vmax.f32 %v281, %v299
        %vm302 = vcmp.eq.s32.totalorder %v241, 0
        %303 = vrot.lane.b32.xlu0 %v300, 8
        %v304 = vpop.permute.xlu0 %303
        %305 = vrot.lane.b32.xlu0 %v301, 8
        %v306 = vpop.permute.xlu0 %305
        %v307 = vsel %vm302, -inf, %v304
        %v308 = vsel %vm302, -inf, %v306
        %vm309 = vcmp.eq.s32.totalorder %v241, 15
        %310 = vrot.lane.b32.xlu0 %v300, 120
        %v311 = vpop.permute.xlu0 %310
        %312 = vrot.lane.b32.xlu0 %v301, 120
        %v313 = vpop.permute.xlu0 %312
        %v314 = vsel %vm309, -inf, %v311
        %v315 = vsel %vm309, -inf, %v313
        %v316 = vmax.f32 %v307, %v314
        %v317 = vmax.f32 %v308, %v315
        %v318 = vmax.f32 %v300, %v316
        %v319 = vmax.f32 %v301, %v317
        %vm320 = vcmp.eq.s32.totalorder %v238, 0
        %vm321 = vcmp.eq.s32.totalorder %v239, 0
        %v322 = vrot.slane %v318, 7
        %v323 = vrot.slane %v319, 7
        %vm324 = vcmp.lt.s32.totalorder %v238, 1
        %v325 = vsel %vm324, %v322, %v323
        %v326 = vsel %vm324, %v323, %v322
        %v327 = vsel %vm320, -inf, %v326
        %v328 = vsel %vm321, -inf, %v325
        %vm329 = vcmp.eq.s32.totalorder %v238, 15
        %vm330 = vcmp.eq.s32.totalorder %v239, 15
        %v331 = vrot.slane %v318, 1
        %v332 = vrot.slane %v319, 1
        %vm333 = vcmp.lt.s32.totalorder %v238, 7
        %v334 = vsel %vm333, %v331, %v332
        %v335 = vsel %vm333, %v332, %v331
        %v336 = vsel %vm329, -inf, %v334
        %v337 = vsel %vm330, -inf, %v335
        %v338 = vmax.f32 %v327, %v336
        %v339 = vmax.f32 %v328, %v337
        %v340 = vmax.f32 %v318, %v338
        %v341 = vmax.f32 %v319, %v339
        %vm342 = vcmp.eq.f32.partialorder %v340, %v280
        %vm343 = vcmp.eq.f32.partialorder %v341, %v281
        %v344 = vsel %vm342, %v280, 0.0
        %v345 = vsel %vm343, %v281, 0.0
        %vm348 = vcmp.lt.s32.totalorder %v344, 0
        %vm349 = vcmp.lt.s32.totalorder %v345, 0
        %v350 = vsel %vm348, 2147483647, 0
        %v351 = vsel %vm349, 2147483647, 0
        %v352 = vxor.u32 %v344, %v350
        %v353 = vxor.u32 %v345, %v351
        %v354 = vand.u32 %v352, 4294965248
        %v355 = vand.u32 %v353, 4294965248
        %v356 = vor.u32 %v354, %v246
        %v357 = vor.u32 %v355, %v247
        %vm358 = vcmp.gt.s32.totalorder %v356, %v357
        %v359 = vsel %vm358, %v356, %v357
        %v360 = vand.u32 %v359, 65535
        %v361 = vshra.s32 %v359, 16
        %v362 = vcvt.s32.f32 %v360
        %v363 = vcvt.s32.f32 %v361
        %364 = vmax.xlane.f32.xlu0 %v363
        %v365 = vpop.xlane.xlu0 %364
        %vm366 = vcmp.eq.f32.partialorder %v363, %v365
        %v367 = vsel %vm366, %v362, -inf
        %368 = vmax.xlane.f32.xlu0 %v367
        %v369 = vpop.xlane.xlu0 %368
        %v370 = vcvt.f32.s32 %v369
        %v371 = vcvt.f32.s32 %v365
        %v372 = vshll.u32 %v371, 16
        %v373 = vadd.s32 %v372, %v370
        %v374 = vrot.slane %v373, 4
        %vm375 = vcmp.gt.s32.totalorder %v373, %v374
        %v376 = vsel %vm375, %v373, %v374
        %v377 = vrot.slane %v376, 2
        %vm378 = vcmp.gt.s32.totalorder %v376, %v377
        %v379 = vsel %vm378, %v376, %v377
        %v380 = vrot.slane %v379, 1
        %vm381 = vcmp.gt.s32.totalorder %v379, %v380
        %v382 = vsel %vm381, %v379, %v380
        %s383 = vtos %v382
        %v384 = vstv %s383
        %vm385 = vcmp.eq.s32.totalorder %v356, %v384
        %vm386 = vcmp.eq.s32.totalorder %v357, %v384
        %v387 = vsel %vm385, 2147483648, %v356
        %v388 = vsel %vm386, 2147483648, %v357
        %vm389 = vcmp.gt.s32.totalorder %v387, %v388
        %v390 = vsel %vm389, %v387, %v388
        %v391 = vand.u32 %v390, 65535
        %v392 = vshra.s32 %v390, 16
        %v393 = vcvt.s32.f32 %v391
        %v394 = vcvt.s32.f32 %v392
        %395 = vmax.xlane.f32.xlu0 %v394
        %v396 = vpop.xlane.xlu0 %395
        %vm397 = vcmp.eq.f32.partialorder %v394, %v396
        %v398 = vsel %vm397, %v393, -inf
        %399 = vmax.xlane.f32.xlu0 %v398
        %v400 = vpop.xlane.xlu0 %399
        %v401 = vcvt.f32.s32 %v400
        %v402 = vcvt.f32.s32 %v396
        %v403 = vshll.u32 %v402, 16
        %v404 = vadd.s32 %v403, %v401
        %v405 = vrot.slane %v404, 4
        %vm406 = vcmp.gt.s32.totalorder %v404, %v405
        %v407 = vsel %vm406, %v404, %v405
        %v408 = vrot.slane %v407, 2
        %vm409 = vcmp.gt.s32.totalorder %v407, %v408
        %v410 = vsel %vm409, %v407, %v408
        %v411 = vrot.slane %v410, 1
        %vm412 = vcmp.gt.s32.totalorder %v410, %v411
        %v413 = vsel %vm412, %v410, %v411
        %s414 = vtos %v413
        %v415 = vstv %s414
        %vm416 = vcmp.eq.s32.totalorder %v387, %v415
        %vm417 = vcmp.eq.s32.totalorder %v388, %v415
        %v418 = vsel %vm416, 2147483648, %v387
        %v419 = vsel %vm417, 2147483648, %v388
        %vm420 = vcmp.gt.s32.totalorder %v418, %v419
        %v421 = vsel %vm420, %v418, %v419
        %v422 = vand.u32 %v421, 65535
        %v423 = vshra.s32 %v421, 16
        %v424 = vcvt.s32.f32 %v422
        %v425 = vcvt.s32.f32 %v423
        %426 = vmax.xlane.f32.xlu0 %v425
        %v427 = vpop.xlane.xlu0 %426
        %vm428 = vcmp.eq.f32.partialorder %v425, %v427
        %v429 = vsel %vm428, %v424, -inf
        %430 = vmax.xlane.f32.xlu0 %v429
        %v431 = vpop.xlane.xlu0 %430
        %v432 = vcvt.f32.s32 %v431
        %v433 = vcvt.f32.s32 %v427
        %v434 = vshll.u32 %v433, 16
        %v435 = vadd.s32 %v434, %v432
        %v436 = vrot.slane %v435, 4
        %vm437 = vcmp.gt.s32.totalorder %v435, %v436
        %v438 = vsel %vm437, %v435, %v436
        %v439 = vrot.slane %v438, 2
        %vm440 = vcmp.gt.s32.totalorder %v438, %v439
        %v441 = vsel %vm440, %v438, %v439
        %v442 = vrot.slane %v441, 1
        %vm443 = vcmp.gt.s32.totalorder %v441, %v442
        %v444 = vsel %vm443, %v441, %v442
        %s445 = vtos %v444
        %v446 = vstv %s445
        %vm447 = vcmp.eq.s32.totalorder %v418, %v446
        %vm448 = vcmp.eq.s32.totalorder %v419, %v446
        %v449 = vsel %vm447, 2147483648, %v418
        %v450 = vsel %vm448, 2147483648, %v419
        %vm451 = vcmp.gt.s32.totalorder %v449, %v450
        %v452 = vsel %vm451, %v449, %v450
        %v453 = vand.u32 %v452, 65535
        %v454 = vshra.s32 %v452, 16
        %v455 = vcvt.s32.f32 %v453
        %v456 = vcvt.s32.f32 %v454
        %457 = vmax.xlane.f32.xlu0 %v456
        %v458 = vpop.xlane.xlu0 %457
        %vm459 = vcmp.eq.f32.partialorder %v456, %v458
        %v460 = vsel %vm459, %v455, -inf
        %461 = vmax.xlane.f32.xlu0 %v460
        %v462 = vpop.xlane.xlu0 %461
        %v463 = vcvt.f32.s32 %v462
        %v464 = vcvt.f32.s32 %v458
        %v465 = vshll.u32 %v464, 16
        %v466 = vadd.s32 %v465, %v463
        %v467 = vrot.slane %v466, 4
        %vm468 = vcmp.gt.s32.totalorder %v466, %v467
        %v469 = vsel %vm468, %v466, %v467
        %v470 = vrot.slane %v469, 2
        %vm471 = vcmp.gt.s32.totalorder %v469, %v470
        %v472 = vsel %vm471, %v469, %v470
        %v473 = vrot.slane %v472, 1
        %vm474 = vcmp.gt.s32.totalorder %v472, %v473
        %v475 = vsel %vm474, %v472, %v473
        %s476 = vtos %v475
        %v477 = vstv %s476
        %vm478 = vcmp.eq.s32.totalorder %v449, %v477
        %vm479 = vcmp.eq.s32.totalorder %v450, %v477
        %v480 = vsel %vm478, 2147483648, %v449
        %v481 = vsel %vm479, 2147483648, %v450
        %vm482 = vcmp.gt.s32.totalorder %v480, %v481
        %v483 = vsel %vm482, %v480, %v481
        %v484 = vand.u32 %v483, 65535
        %v485 = vshra.s32 %v483, 16
        %v486 = vcvt.s32.f32 %v484
        %v487 = vcvt.s32.f32 %v485
        %488 = vmax.xlane.f32.xlu0 %v487
        %v489 = vpop.xlane.xlu0 %488
        %vm490 = vcmp.eq.f32.partialorder %v487, %v489
        %v491 = vsel %vm490, %v486, -inf
        %492 = vmax.xlane.f32.xlu0 %v491
        %v493 = vpop.xlane.xlu0 %492
        %v494 = vcvt.f32.s32 %v493
        %v495 = vcvt.f32.s32 %v489
        %v496 = vshll.u32 %v495, 16
        %v497 = vadd.s32 %v496, %v494
        %v498 = vrot.slane %v497, 4
        %vm499 = vcmp.gt.s32.totalorder %v497, %v498
        %v500 = vsel %vm499, %v497, %v498
        %v501 = vrot.slane %v500, 2
        %vm502 = vcmp.gt.s32.totalorder %v500, %v501
        %v503 = vsel %vm502, %v500, %v501
        %v504 = vrot.slane %v503, 1
        %vm505 = vcmp.gt.s32.totalorder %v503, %v504
        %v506 = vsel %vm505, %v503, %v504
        %s507 = vtos %v506
        %s508 = sand.u32 %s383, 2047
        %s509 = ssub.s32 2047, %s508
        %v510 = vstv %s509
        %vm511 = vcmp.eq.s32.totalorder %v244, %v510
        %vm512 = vcmp.eq.s32.totalorder %v245, %v510
        %v513 = vsel %vm511, %v344, -inf
        %v514 = vsel %vm512, %v345, -inf
        %v515 = vmax.f32 %v513, %v514
        %516 = vmax.xlane.f32.xlu0 %v515
        %v517 = vpop.xlane.xlu0 %516
        %v518 = vrot.slane %v517, 4
        %v519 = vmax.f32 %v517, %v518
        %v520 = vrot.slane %v519, 2
        %v521 = vmax.f32 %v519, %v520
        %v522 = vrot.slane %v521, 1
        %v523 = vmax.f32 %v521, %v522
        %s524 = vtos %v523
        %vm525 = vcmp.eq.s32.totalorder %v236, 0
        %v526 = vstv %s524
        %v527 = vsel %vm525, %v526, 0.0
        %v528 = vsel %vm525, %v510, 0
        %s529 = sand.u32 %s414, 2047
        %s530 = ssub.s32 2047, %s529
        %v531 = vstv %s530
        %vm532 = vcmp.eq.s32.totalorder %v244, %v531
        %vm533 = vcmp.eq.s32.totalorder %v245, %v531
        %v534 = vsel %vm532, %v344, -inf
        %v535 = vsel %vm533, %v345, -inf
        %v536 = vmax.f32 %v534, %v535
        %537 = vmax.xlane.f32.xlu0 %v536
        %v538 = vpop.xlane.xlu0 %537
        %v539 = vrot.slane %v538, 4
        %v540 = vmax.f32 %v538, %v539
        %v541 = vrot.slane %v540, 2
        %v542 = vmax.f32 %v540, %v541
        %v543 = vrot.slane %v542, 1
        %v544 = vmax.f32 %v542, %v543
        %s545 = vtos %v544
        %vm546 = vcmp.eq.s32.totalorder %v236, 1
        %v547 = vstv %s545
        %v548 = vsel %vm546, %v547, %v527
        %v549 = vsel %vm546, %v531, %v528
        %s550 = sand.u32 %s445, 2047
        %s551 = ssub.s32 2047, %s550
        %v552 = vstv %s551
        %vm553 = vcmp.eq.s32.totalorder %v244, %v552
        %vm554 = vcmp.eq.s32.totalorder %v245, %v552
        %v555 = vsel %vm553, %v344, -inf
        %v556 = vsel %vm554, %v345, -inf
        %v557 = vmax.f32 %v555, %v556
        %558 = vmax.xlane.f32.xlu0 %v557
        %v559 = vpop.xlane.xlu0 %558
        %v560 = vrot.slane %v559, 4
        %v561 = vmax.f32 %v559, %v560
        %v562 = vrot.slane %v561, 2
        %v563 = vmax.f32 %v561, %v562
        %v564 = vrot.slane %v563, 1
        %v565 = vmax.f32 %v563, %v564
        %s566 = vtos %v565
        %vm567 = vcmp.eq.s32.totalorder %v236, 2
        %v568 = vstv %s566
        %v569 = vsel %vm567, %v568, %v548
        %v570 = vsel %vm567, %v552, %v549
        %s571 = sand.u32 %s476, 2047
        %s572 = ssub.s32 2047, %s571
        %v573 = vstv %s572
        %vm574 = vcmp.eq.s32.totalorder %v244, %v573
        %vm575 = vcmp.eq.s32.totalorder %v245, %v573
        %v576 = vsel %vm574, %v344, -inf
        %v577 = vsel %vm575, %v345, -inf
        %v578 = vmax.f32 %v576, %v577
        %579 = vmax.xlane.f32.xlu0 %v578
        %v580 = vpop.xlane.xlu0 %579
        %v581 = vrot.slane %v580, 4
        %v582 = vmax.f32 %v580, %v581
        %v583 = vrot.slane %v582, 2
        %v584 = vmax.f32 %v582, %v583
        %v585 = vrot.slane %v584, 1
        %v586 = vmax.f32 %v584, %v585
        %s587 = vtos %v586
        %vm588 = vcmp.eq.s32.totalorder %v236, 3
        %v589 = vstv %s587
        %v590 = vsel %vm588, %v589, %v569
        %v591 = vsel %vm588, %v573, %v570
        %s592 = sand.u32 %s507, 2047
        %s593 = ssub.s32 2047, %s592
        %v594 = vstv %s593
        %vm595 = vcmp.eq.s32.totalorder %v244, %v594
        %vm596 = vcmp.eq.s32.totalorder %v245, %v594
        %v597 = vsel %vm595, %v344, -inf
        %v598 = vsel %vm596, %v345, -inf
        %v599 = vmax.f32 %v597, %v598
        %600 = vmax.xlane.f32.xlu0 %v599
        %v601 = vpop.xlane.xlu0 %600
        %v602 = vrot.slane %v601, 4
        %v603 = vmax.f32 %v601, %v602
        %v604 = vrot.slane %v603, 2
        %v605 = vmax.f32 %v603, %v604
        %v606 = vrot.slane %v605, 1
        %v607 = vmax.f32 %v605, %v606
        %s608 = vtos %v607
        %vm609 = vcmp.eq.s32.totalorder %v236, 4
        %v610 = vstv %s608
        %v611 = vsel %vm609, %v610, %v590
        %v612 = vsel %vm609, %v594, %v591
        %vm614 = vcmp.eq.s32.totalorder %v238, 1
        %v615 = vsel %vm614, %v612, 0
        %v616 = vsel %vm320, %v611, %v615
        %617 = vst [vmem:[%s233] sm:$0xff] %v616
        %s618 = scalar_lea.vmem %s220, 64
        %v619 = vld [vmem:[%s618] sm:$0xff]
        %v620 = vld [vmem:[%s618 + $0x8] sm:$0xff]
        %v621 = vld [vmem:[%s618 + $0x10] sm:$0xff]
        %v622 = vld [vmem:[%s618 + $0x18] sm:$0xff]
        %v623 = vld [vmem:[%s618 + $0x20] sm:$0xff]
        %v624 = vld [vmem:[%s618 + $0x28] sm:$0xff]
        %v625 = vld [vmem:[%s618 + $0x30] sm:$0xff]
        %v626 = vld [vmem:[%s618 + $0x38] sm:$0xff]
        %s627 = sld [smem:[#allocation3]]
        %v628 = vstv %s627
        %v629 = vmul.f32 %v628, %v619
        %v630 = vmul.f32 %v628, %v620
        %s631 = sld [smem:[#allocation3 + $0x1]]
        %v632 = vstv %s631
        %v633 = vmul.f32 %v632, %v621
        %v634 = vmul.f32 %v632, %v622
        %v635 = vadd.f32 %v629, %v633
        %v636 = vadd.f32 %v630, %v634
        %s637 = sld [smem:[#allocation3 + $0x2]]
        %v638 = vstv %s637
        %v639 = vmul.f32 %v638, %v623
        %v640 = vmul.f32 %v638, %v624
        %v641 = vadd.f32 %v635, %v639
        %v642 = vadd.f32 %v636, %v640
        %s643 = sld [smem:[#allocation3 + $0x3]]
        %v644 = vstv %s643
        %v645 = vmul.f32 %v644, %v625
        %v646 = vmul.f32 %v644, %v626
        %v647 = vadd.f32 %v641, %v645
        %v648 = vadd.f32 %v642, %v646
        %s649 = sld [smem:[#allocation2]]
        %v650 = vstv %s649
        %v651 = vadd.f32 %v647, %v650
        %v652 = vadd.f32 %v648, %v650
        %s653 = scalar_lea.vmem %s227, 16
        %654 = vst [vmem:[%s653] sm:$0xff] %v651
        %655 = vst [vmem:[%s653 + $0x8] sm:$0xff] %v652
        %656 = vrot.lane.b32.xlu0 %v651, 1
        %v657 = vpop.permute.xlu0 %656
        %658 = vrot.lane.b32.xlu0 %v652, 1
        %v659 = vpop.permute.xlu0 %658
        %v660 = vsel %vm284, -inf, %v657
        %v661 = vsel %vm284, -inf, %v659
        %662 = vrot.lane.b32.xlu0 %v651, 127
        %v663 = vpop.permute.xlu0 %662
        %664 = vrot.lane.b32.xlu0 %v652, 127
        %v665 = vpop.permute.xlu0 %664
        %v666 = vsel %vm291, -inf, %v663
        %v667 = vsel %vm291, -inf, %v665
        %v668 = vmax.f32 %v660, %v666
        %v669 = vmax.f32 %v661, %v667
        %v670 = vmax.f32 %v651, %v668
        %v671 = vmax.f32 %v652, %v669
        %672 = vrot.lane.b32.xlu0 %v670, 8
        %v673 = vpop.permute.xlu0 %672
        %674 = vrot.lane.b32.xlu0 %v671, 8
        %v675 = vpop.permute.xlu0 %674
        %v676 = vsel %vm302, -inf, %v673
        %v677 = vsel %vm302, -inf, %v675
        %678 = vrot.lane.b32.xlu0 %v670, 120
        %v679 = vpop.permute.xlu0 %678
        %680 = vrot.lane.b32.xlu0 %v671, 120
        %v681 = vpop.permute.xlu0 %680
        %v682 = vsel %vm309, -inf, %v679
        %v683 = vsel %vm309, -inf, %v681
        %v684 = vmax.f32 %v676, %v682
        %v685 = vmax.f32 %v677, %v683
        %v686 = vmax.f32 %v670, %v684
        %v687 = vmax.f32 %v671, %v685
        %v688 = vrot.slane %v686, 7
        %v689 = vrot.slane %v687, 7
        %v690 = vsel %vm324, %v688, %v689
        %v691 = vsel %vm324, %v689, %v688
        %v692 = vsel %vm320, -inf, %v691
        %v693 = vsel %vm321, -inf, %v690
        %v694 = vrot.slane %v686, 1
        %v695 = vrot.slane %v687, 1
        %v696 = vsel %vm333, %v694, %v695
        %v697 = vsel %vm333, %v695, %v694
        %v698 = vsel %vm329, -inf, %v696
        %v699 = vsel %vm330, -inf, %v697
        %v700 = vmax.f32 %v692, %v698
        %v701 = vmax.f32 %v693, %v699
        %v702 = vmax.f32 %v686, %v700
        %v703 = vmax.f32 %v687, %v701
        %vm704 = vcmp.eq.f32.partialorder %v702, %v651
        %vm705 = vcmp.eq.f32.partialorder %v703, %v652
        %v706 = vsel %vm704, %v651, 0.0
        %v707 = vsel %vm705, %v652, 0.0
        %vm710 = vcmp.lt.s32.totalorder %v706, 0
        %vm711 = vcmp.lt.s32.totalorder %v707, 0
        %v712 = vsel %vm710, 2147483647, 0
        %v713 = vsel %vm711, 2147483647, 0
        %v714 = vxor.u32 %v706, %v712
        %v715 = vxor.u32 %v707, %v713
        %v716 = vand.u32 %v714, 4294965248
        %v717 = vand.u32 %v715, 4294965248
        %v718 = vor.u32 %v716, %v246
        %v719 = vor.u32 %v717, %v247
        %vm720 = vcmp.gt.s32.totalorder %v718, %v719
        %v721 = vsel %vm720, %v718, %v719
        %v722 = vand.u32 %v721, 65535
        %v723 = vshra.s32 %v721, 16
        %v724 = vcvt.s32.f32 %v722
        %v725 = vcvt.s32.f32 %v723
        %726 = vmax.xlane.f32.xlu0 %v725
        %v727 = vpop.xlane.xlu0 %726
        %vm728 = vcmp.eq.f32.partialorder %v725, %v727
        %v729 = vsel %vm728, %v724, -inf
        %730 = vmax.xlane.f32.xlu0 %v729
        %v731 = vpop.xlane.xlu0 %730
        %v732 = vcvt.f32.s32 %v731
        %v733 = vcvt.f32.s32 %v727
        %v734 = vshll.u32 %v733, 16
        %v735 = vadd.s32 %v734, %v732
        %v736 = vrot.slane %v735, 4
        %vm737 = vcmp.gt.s32.totalorder %v735, %v736
        %v738 = vsel %vm737, %v735, %v736
        %v739 = vrot.slane %v738, 2
        %vm740 = vcmp.gt.s32.totalorder %v738, %v739
        %v741 = vsel %vm740, %v738, %v739
        %v742 = vrot.slane %v741, 1
        %vm743 = vcmp.gt.s32.totalorder %v741, %v742
        %v744 = vsel %vm743, %v741, %v742
        %s745 = vtos %v744
        %v746 = vstv %s745
        %vm747 = vcmp.eq.s32.totalorder %v718, %v746
        %vm748 = vcmp.eq.s32.totalorder %v719, %v746
        %v749 = vsel %vm747, 2147483648, %v718
        %v750 = vsel %vm748, 2147483648, %v719
        %vm751 = vcmp.gt.s32.totalorder %v749, %v750
        %v752 = vsel %vm751, %v749, %v750
        %v753 = vand.u32 %v752, 65535
        %v754 = vshra.s32 %v752, 16
        %v755 = vcvt.s32.f32 %v753
        %v756 = vcvt.s32.f32 %v754
        %757 = vmax.xlane.f32.xlu0 %v756
        %v758 = vpop.xlane.xlu0 %757
        %vm759 = vcmp.eq.f32.partialorder %v756, %v758
        %v760 = vsel %vm759, %v755, -inf
        %761 = vmax.xlane.f32.xlu0 %v760
        %v762 = vpop.xlane.xlu0 %761
        %v763 = vcvt.f32.s32 %v762
        %v764 = vcvt.f32.s32 %v758
        %v765 = vshll.u32 %v764, 16
        %v766 = vadd.s32 %v765, %v763
        %v767 = vrot.slane %v766, 4
        %vm768 = vcmp.gt.s32.totalorder %v766, %v767
        %v769 = vsel %vm768, %v766, %v767
        %v770 = vrot.slane %v769, 2
        %vm771 = vcmp.gt.s32.totalorder %v769, %v770
        %v772 = vsel %vm771, %v769, %v770
        %v773 = vrot.slane %v772, 1
        %vm774 = vcmp.gt.s32.totalorder %v772, %v773
        %v775 = vsel %vm774, %v772, %v773
        %s776 = vtos %v775
        %v777 = vstv %s776
        %vm778 = vcmp.eq.s32.totalorder %v749, %v777
        %vm779 = vcmp.eq.s32.totalorder %v750, %v777
        %v780 = vsel %vm778, 2147483648, %v749
        %v781 = vsel %vm779, 2147483648, %v750
        %vm782 = vcmp.gt.s32.totalorder %v780, %v781
        %v783 = vsel %vm782, %v780, %v781
        %v784 = vand.u32 %v783, 65535
        %v785 = vshra.s32 %v783, 16
        %v786 = vcvt.s32.f32 %v784
        %v787 = vcvt.s32.f32 %v785
        %788 = vmax.xlane.f32.xlu0 %v787
        %v789 = vpop.xlane.xlu0 %788
        %vm790 = vcmp.eq.f32.partialorder %v787, %v789
        %v791 = vsel %vm790, %v786, -inf
        %792 = vmax.xlane.f32.xlu0 %v791
        %v793 = vpop.xlane.xlu0 %792
        %v794 = vcvt.f32.s32 %v793
        %v795 = vcvt.f32.s32 %v789
        %v796 = vshll.u32 %v795, 16
        %v797 = vadd.s32 %v796, %v794
        %v798 = vrot.slane %v797, 4
        %vm799 = vcmp.gt.s32.totalorder %v797, %v798
        %v800 = vsel %vm799, %v797, %v798
        %v801 = vrot.slane %v800, 2
        %vm802 = vcmp.gt.s32.totalorder %v800, %v801
        %v803 = vsel %vm802, %v800, %v801
        %v804 = vrot.slane %v803, 1
        %vm805 = vcmp.gt.s32.totalorder %v803, %v804
        %v806 = vsel %vm805, %v803, %v804
        %s807 = vtos %v806
        %v808 = vstv %s807
        %vm809 = vcmp.eq.s32.totalorder %v780, %v808
        %vm810 = vcmp.eq.s32.totalorder %v781, %v808
        %v811 = vsel %vm809, 2147483648, %v780
        %v812 = vsel %vm810, 2147483648, %v781
        %vm813 = vcmp.gt.s32.totalorder %v811, %v812
        %v814 = vsel %vm813, %v811, %v812
        %v815 = vand.u32 %v814, 65535
        %v816 = vshra.s32 %v814, 16
        %v817 = vcvt.s32.f32 %v815
        %v818 = vcvt.s32.f32 %v816
        %819 = vmax.xlane.f32.xlu0 %v818
        %v820 = vpop.xlane.xlu0 %819
        %vm821 = vcmp.eq.f32.partialorder %v818, %v820
        %v822 = vsel %vm821, %v817, -inf
        %823 = vmax.xlane.f32.xlu0 %v822
        %v824 = vpop.xlane.xlu0 %823
        %v825 = vcvt.f32.s32 %v824
        %v826 = vcvt.f32.s32 %v820
        %v827 = vshll.u32 %v826, 16
        %v828 = vadd.s32 %v827, %v825
        %v829 = vrot.slane %v828, 4
        %vm830 = vcmp.gt.s32.totalorder %v828, %v829
        %v831 = vsel %vm830, %v828, %v829
        %v832 = vrot.slane %v831, 2
        %vm833 = vcmp.gt.s32.totalorder %v831, %v832
        %v834 = vsel %vm833, %v831, %v832
        %v835 = vrot.slane %v834, 1
        %vm836 = vcmp.gt.s32.totalorder %v834, %v835
        %v837 = vsel %vm836, %v834, %v835
        %s838 = vtos %v837
        %v839 = vstv %s838
        %vm840 = vcmp.eq.s32.totalorder %v811, %v839
        %vm841 = vcmp.eq.s32.totalorder %v812, %v839
        %v842 = vsel %vm840, 2147483648, %v811
        %v843 = vsel %vm841, 2147483648, %v812
        %vm844 = vcmp.gt.s32.totalorder %v842, %v843
        %v845 = vsel %vm844, %v842, %v843
        %v846 = vand.u32 %v845, 65535
        %v847 = vshra.s32 %v845, 16
        %v848 = vcvt.s32.f32 %v846
        %v849 = vcvt.s32.f32 %v847
        %850 = vmax.xlane.f32.xlu0 %v849
        %v851 = vpop.xlane.xlu0 %850
        %vm852 = vcmp.eq.f32.partialorder %v849, %v851
        %v853 = vsel %vm852, %v848, -inf
        %854 = vmax.xlane.f32.xlu0 %v853
        %v855 = vpop.xlane.xlu0 %854
        %v856 = vcvt.f32.s32 %v855
        %v857 = vcvt.f32.s32 %v851
        %v858 = vshll.u32 %v857, 16
        %v859 = vadd.s32 %v858, %v856
        %v860 = vrot.slane %v859, 4
        %vm861 = vcmp.gt.s32.totalorder %v859, %v860
        %v862 = vsel %vm861, %v859, %v860
        %v863 = vrot.slane %v862, 2
        %vm864 = vcmp.gt.s32.totalorder %v862, %v863
        %v865 = vsel %vm864, %v862, %v863
        %v866 = vrot.slane %v865, 1
        %vm867 = vcmp.gt.s32.totalorder %v865, %v866
        %v868 = vsel %vm867, %v865, %v866
        %s869 = vtos %v868
        %s870 = sand.u32 %s745, 2047
        %s871 = ssub.s32 2047, %s870
        %v872 = vstv %s871
        %vm873 = vcmp.eq.s32.totalorder %v244, %v872
        %vm874 = vcmp.eq.s32.totalorder %v245, %v872
        %v875 = vsel %vm873, %v706, -inf
        %v876 = vsel %vm874, %v707, -inf
        %v877 = vmax.f32 %v875, %v876
        %878 = vmax.xlane.f32.xlu0 %v877
        %v879 = vpop.xlane.xlu0 %878
        %v880 = vrot.slane %v879, 4
        %v881 = vmax.f32 %v879, %v880
        %v882 = vrot.slane %v881, 2
        %v883 = vmax.f32 %v881, %v882
        %v884 = vrot.slane %v883, 1
        %v885 = vmax.f32 %v883, %v884
        %s886 = vtos %v885
        %v887 = vstv %s886
        %v888 = vsel %vm525, %v887, 0.0
        %v889 = vsel %vm525, %v872, 0
        %s890 = sand.u32 %s776, 2047
        %s891 = ssub.s32 2047, %s890
        %v892 = vstv %s891
        %vm893 = vcmp.eq.s32.totalorder %v244, %v892
        %vm894 = vcmp.eq.s32.totalorder %v245, %v892
        %v895 = vsel %vm893, %v706, -inf
        %v896 = vsel %vm894, %v707, -inf
        %v897 = vmax.f32 %v895, %v896
        %898 = vmax.xlane.f32.xlu0 %v897
        %v899 = vpop.xlane.xlu0 %898
        %v900 = vrot.slane %v899, 4
        %v901 = vmax.f32 %v899, %v900
        %v902 = vrot.slane %v901, 2
        %v903 = vmax.f32 %v901, %v902
        %v904 = vrot.slane %v903, 1
        %v905 = vmax.f32 %v903, %v904
        %s906 = vtos %v905
        %v907 = vstv %s906
        %v908 = vsel %vm546, %v907, %v888
        %v909 = vsel %vm546, %v892, %v889
        %s910 = sand.u32 %s807, 2047
        %s911 = ssub.s32 2047, %s910
        %v912 = vstv %s911
        %vm913 = vcmp.eq.s32.totalorder %v244, %v912
        %vm914 = vcmp.eq.s32.totalorder %v245, %v912
        %v915 = vsel %vm913, %v706, -inf
        %v916 = vsel %vm914, %v707, -inf
        %v917 = vmax.f32 %v915, %v916
        %918 = vmax.xlane.f32.xlu0 %v917
        %v919 = vpop.xlane.xlu0 %918
        %v920 = vrot.slane %v919, 4
        %v921 = vmax.f32 %v919, %v920
        %v922 = vrot.slane %v921, 2
        %v923 = vmax.f32 %v921, %v922
        %v924 = vrot.slane %v923, 1
        %v925 = vmax.f32 %v923, %v924
        %s926 = vtos %v925
        %v927 = vstv %s926
        %v928 = vsel %vm567, %v927, %v908
        %v929 = vsel %vm567, %v912, %v909
        %s930 = sand.u32 %s838, 2047
        %s931 = ssub.s32 2047, %s930
        %v932 = vstv %s931
        %vm933 = vcmp.eq.s32.totalorder %v244, %v932
        %vm934 = vcmp.eq.s32.totalorder %v245, %v932
        %v935 = vsel %vm933, %v706, -inf
        %v936 = vsel %vm934, %v707, -inf
        %v937 = vmax.f32 %v935, %v936
        %938 = vmax.xlane.f32.xlu0 %v937
        %v939 = vpop.xlane.xlu0 %938
        %v940 = vrot.slane %v939, 4
        %v941 = vmax.f32 %v939, %v940
        %v942 = vrot.slane %v941, 2
        %v943 = vmax.f32 %v941, %v942
        %v944 = vrot.slane %v943, 1
        %v945 = vmax.f32 %v943, %v944
        %s946 = vtos %v945
        %v947 = vstv %s946
        %v948 = vsel %vm588, %v947, %v928
        %v949 = vsel %vm588, %v932, %v929
        %s950 = sand.u32 %s869, 2047
        %s951 = ssub.s32 2047, %s950
        %v952 = vstv %s951
        %vm953 = vcmp.eq.s32.totalorder %v244, %v952
        %vm954 = vcmp.eq.s32.totalorder %v245, %v952
        %v955 = vsel %vm953, %v706, -inf
        %v956 = vsel %vm954, %v707, -inf
        %v957 = vmax.f32 %v955, %v956
        %958 = vmax.xlane.f32.xlu0 %v957
        %v959 = vpop.xlane.xlu0 %958
        %v960 = vrot.slane %v959, 4
        %v961 = vmax.f32 %v959, %v960
        %v962 = vrot.slane %v961, 2
        %v963 = vmax.f32 %v961, %v962
        %v964 = vrot.slane %v963, 1
        %v965 = vmax.f32 %v963, %v964
        %s966 = vtos %v965
        %v967 = vstv %s966
        %v968 = vsel %vm609, %v967, %v948
        %v969 = vsel %vm609, %v952, %v949
        %v971 = vsel %vm614, %v969, 0
        %v972 = vsel %vm320, %v968, %v971
        %s973 = scalar_lea.vmem %s233, 8
        %974 = vst [vmem:[%s973] sm:$0xff] %v972
        %s975 = smul.u32 2, %s18
        %p976 = scmp.lt.s32.totalorder %s975, 3
        %s977 = scalar_select %p976, %s975, 3
        %s978 = smul.addr %s977, 2
        %s979 = smul.addr %s978, 8
        %s980 = scalar_lea.vmem %s3, %s979
        %s981 = smul.u32 2, %s18
        %p982 = scmp.lt.s32.totalorder %s981, 3
        %s983 = scalar_select %p982, %s981, 3
        %s984 = smul.addr %s983, 8
        %s985 = scalar_lea.vmem %s4, %s984
        // Predicated region
        $region37: #{cuboid_proposal_net_forward.1} parent=31 // pred_check
          %p986 = pneg %p104
        $region38: #{cuboid_proposal_net_forward.1} parent=31 // pred_check_branch
          %988 = sbr.rel (%p986) target = $region40
        $region39: #{cuboid_proposal_net_forward.1} parent=31 // pred_region
          %s989 = smul.u32 2, %s18
        $region40: #{cuboid_proposal_net_forward.1} parent=31 // pred_fallthru
          _
        // Predicated region
        $region41: #{cuboid_proposal_net_forward.1} parent=31 // pred_check
          %p990 = pneg %p130
        $region42: #{cuboid_proposal_net_forward.1} parent=31 // pred_check_branch
          %992 = sbr.rel (%p990) target = $region44
        $region43: #{cuboid_proposal_net_forward.1} parent=31 // pred_region
          %s993 = smul.u32 2, %s18
        $region44: #{cuboid_proposal_net_forward.1} parent=31 // pred_fallthru
          _
      $region32: #{cuboid_proposal_net_forward.1} parent=5 // pred_fallthru
        _
      %p994 = scmp.le.s32.totalorder 2, %s13
      // Predicated region
      $region45: #{cuboid_proposal_net_forward.1} parent=5 // pred_check
        %p995 = pneg %p994
      $region46: #{cuboid_proposal_net_forward.1} parent=5 // pred_check_branch
        %997 = sbr.rel (%p995) target = $region48
      $region47: #{cuboid_proposal_net_forward.1} parent=5 // pred_region
        %s998 = ssub.s32 %s13, 2
        // Predicated region
        $region49: #{cuboid_proposal_net_forward.1} parent=47 // pred_check
          %p999 = pneg %p110
        $region50: #{cuboid_proposal_net_forward.1} parent=47 // pred_check_branch
          %1001 = sbr.rel (%p999) target = $region52
        $region51: #{cuboid_proposal_net_forward.1} parent=47 // pred_region
          %s1002 = smul.u32 2, %s19
          %p1003 = scmp.lt.s32.totalorder %s1002, 3
          %s1004 = scalar_select %p1003, %s1002, 3
          %s1005 = smul.addr %s1004, 2
          %s1006 = smul.addr %s1005, 8
          %s1007 = scalar_lea.vmem %s3, %s1006
        $region52: #{cuboid_proposal_net_forward.1} parent=47 // pred_fallthru
          _
        // Predicated region
        $region53: #{cuboid_proposal_net_forward.1} parent=47 // pred_check
          %p1008 = pneg %p136
        $region54: #{cuboid_proposal_net_forward.1} parent=47 // pred_check_branch
          %1010 = sbr.rel (%p1008) target = $region56
        $region55: #{cuboid_proposal_net_forward.1} parent=47 // pred_region
          %s1011 = smul.u32 2, %s19
          %p1012 = scmp.lt.s32.totalorder %s1011, 3
          %s1013 = scalar_select %p1012, %s1011, 3
          %s1014 = smul.addr %s1013, 8
          %s1015 = scalar_lea.vmem %s4, %s1014
        $region56: #{cuboid_proposal_net_forward.1} parent=47 // pred_fallthru
          _
      $region48: #{cuboid_proposal_net_forward.1} parent=5 // pred_fallthru
        _
    $region6: #{cuboid_proposal_net_forward.1} parent=1 // loop_footer
      %s17 = sadd.s32 1, %s13
    $region7: #{cuboid_proposal_net_forward.1} parent=1 // loop_footer_branch
      %12 = sbr.rel target = $region3
    $region8: #{cuboid_proposal_net_forward.1} parent=1 // loop_exit
      _
    %1016 = vsyncpa [#allocation4], 1
    %s1017 = scalar_lea.sflag [#allocation4], 1
    %1018 = vsyncpa %s1017, 1

</llo_original>
